<compile_context>
chip_gen: v6e
topology: v6e:2x2x1
jax: 0.10.0
libtpu: 0.0.40
codegen_flags: <defaults>
</compile_context>

<pallas_src>
import functools

import jax
import jax.numpy as jnp
import numpy as np
from jax import lax
from jax.experimental import pallas as pl
from jax.experimental.pallas import tpu as pltpu

INPUT = 3
HIDDEN = 20
BN_EPS = 1e-5

GATE_W = 128                      # lane stride per gate block (vreg-aligned)
N_GATES = 4
SLAB_LANES = N_GATES * GATE_W     # 512

# Parameter-slab row layout (all section starts sublane(8)-aligned):
ROW_WIH = 0        # rows 0:8   -> W_ih^T in rows 0:3, fused bias in row 3, zeros 4:8
ROW_WHH = 8        # rows 8:28  -> W_hh^T (20 rows)
ROW_WEFF = 32      # rows 32:52 -> w_eff (gamma folded into linear), column 0
ROW_BEFF = 52      # row 52     -> b_eff scalar at lane 0
SLAB_ROWS = 56


def sequence_model_kernel(x_ref, slab_ref, out_ref, gx_ref, *, seq_len, batch):
    """Whole forward pass in one grid-less kernel invocation.

    x_ref:    (S*B, 8)    time-major input, cols 0:3 = x, col 3 = 1.0 (bias), cols 4:8 = 0
    slab_ref: (56, 512)   packed parameters (see row layout above)
    out_ref:  (B, 1)
    gx_ref:   (S*B, 512)  VMEM scratch for the hoisted input projection
    """
    S, B, H = seq_len, batch, HIDDEN

    # Hoisted input projection for ALL timesteps (+ bias via the ones column):
    # one MXU push, off the recurrent critical path.  Parked in VMEM scratch.
    gx_ref[...] = jnp.dot(x_ref[...], slab_ref[ROW_WIH:ROW_WIH + 8, :],
                          preferred_element_type=jnp.float32)          # (S*B, 512)

    w_hh = slab_ref[ROW_WHH:ROW_WHH + H, :]                            # (H, 512)

    h = jnp.zeros((B, H), jnp.float32)
    c = jnp.zeros((B, H), jnp.float32)

    # Fully unrolled recurrence: only (h @ W_hh + precomputed gates_x[t]) sits on
    # the serial dependency chain.  Gate slices start at lane 0/128/256/384, i.e.
    # vreg boundaries, so no cross-lane rotates are needed.
    for t in range(S):
        gates = (gx_ref[t * B:(t + 1) * B, :]
                 + jnp.dot(h, w_hh, preferred_element_type=jnp.float32))   # (B, 512)

        i_g = jax.nn.sigmoid(gates[:, 0 * GATE_W:0 * GATE_W + H])
        f_g = jax.nn.sigmoid(gates[:, 1 * GATE_W:1 * GATE_W + H])
        g_g = jnp.tanh(gates[:, 2 * GATE_W:2 * GATE_W + H])
        o_g = jax.nn.sigmoid(gates[:, 3 * GATE_W:3 * GATE_W + H])

        c = f_g * c + i_g * g_g
        h = o_g * jnp.tanh(c)

    # BatchNorm1d over the batch axis (training-mode statistics, biased variance).
    # mean and E[h^2] are independent sublane reductions; gamma/beta are already
    # folded into w_eff / b_eff host-side.
    mean = jnp.mean(h, axis=0, keepdims=True)                           # (1, H)
    ex2 = jnp.mean(h * h, axis=0, keepdims=True)                        # (1, H)
    var = ex2 - mean * mean
    h_norm = (h - mean) * lax.rsqrt(var + BN_EPS)                       # (B, H)

    w_eff = slab_ref[ROW_WEFF:ROW_WEFF + H, 0:1]                        # (H, 1)
    b_eff = slab_ref[ROW_BEFF:ROW_BEFF + 1, 0:1]                        # (1, 1)
    out_ref[...] = (jnp.dot(h_norm, w_eff, preferred_element_type=jnp.float32)
                    + b_eff)                                            # (B, 1)


def sequence_model(x, slab):
    """x: (B, S, I) batch-first, like the PyTorch module.  slab: packed params."""
    B, S, I = x.shape
    assert I == INPUT
    # torch.squeeze(hn) drops the batch dim too when B == 1; that case diverges.
    assert B > 1, "kernel assumes batch > 1 (torch.squeeze semantics)"

    # Wrapper-side layout plumbing only: time-major, flatten, append the ones
    # column (fused bias) and zero padding to an 8-wide contraction dim.
    x32 = x.astype(jnp.float32)
    x2d = jnp.transpose(x32, (1, 0, 2)).reshape(S * B, I)
    x_pad = jnp.concatenate(
        [x2d,
         jnp.ones((S * B, 1), jnp.float32),
         jnp.zeros((S * B, 8 - I - 1), jnp.float32)], axis=1)           # (S*B, 8)

    kernel = functools.partial(sequence_model_kernel, seq_len=S, batch=B)

    return pl.pallas_call(
        kernel,
        out_shape=jax.ShapeDtypeStruct((B, 1), jnp.float32),
        in_specs=[pl.BlockSpec(memory_space=pltpu.MemorySpace.VMEM),
                  pl.BlockSpec(memory_space=pltpu.MemorySpace.VMEM)],
        out_specs=pl.BlockSpec(memory_space=pltpu.MemorySpace.VMEM),
        scratch_shapes=[pltpu.VMEM((S * B, SLAB_LANES), jnp.float32)],
    )(x_pad, slab)


def init_params(key):
    """Raw parameters in PyTorch layout (for the reference implementation)."""
    ks = jax.random.split(key, 6)
    bound = 1.0 / np.sqrt(HIDDEN)
    return {
        "w_ih": jax.random.uniform(ks[0], (4 * HIDDEN, INPUT), jnp.float32, -bound, bound),
        "w_hh": jax.random.uniform(ks[1], (4 * HIDDEN, HIDDEN), jnp.float32, -bound, bound),
        "b_ih": jax.random.uniform(ks[2], (4 * HIDDEN,), jnp.float32, -bound, bound),
        "b_hh": jax.random.uniform(ks[3], (4 * HIDDEN,), jnp.float32, -bound, bound),
        "gamma": jnp.ones((HIDDEN,), jnp.float32),     # BatchNorm1d default weight
        "beta": jnp.zeros((HIDDEN,), jnp.float32),     # BatchNorm1d default bias
        "w_lin": jax.random.uniform(ks[4], (1, HIDDEN), jnp.float32, -bound, bound),
        "b_lin": jax.random.uniform(ks[5], (1,), jnp.float32, -bound, bound),
    }


def pack_params(p):
    """Pack all parameters into ONE lane/sublane-aligned f32 slab (56, 512).

    Gate g (order i|f|g|o, PyTorch convention) occupies lanes [g*128, g*128+20).
    The LSTM bias (b_ih + b_hh) is folded into row 3 of the W_ih block (paired with
    the ones column of x).  gamma/beta are folded into the Linear layer.
    """
    H, I = HIDDEN, INPUT
    slab = jnp.zeros((SLAB_ROWS, SLAB_LANES), jnp.float32)

    b = p["b_ih"] + p["b_hh"]                           # (4H,)
    for g in range(N_GATES):
        lo = g * GATE_W
        slab = slab.at[ROW_WIH:ROW_WIH + I, lo:lo + H].set(
            jnp.transpose(p["w_ih"][g * H:(g + 1) * H, :]))             # (I, H)
        slab = slab.at[ROW_WIH + I, lo:lo + H].set(b[g * H:(g + 1) * H])
        slab = slab.at[ROW_WHH:ROW_WHH + H, lo:lo + H].set(
            jnp.transpose(p["w_hh"][g * H:(g + 1) * H, :]))             # (H, H)

    # Fold BatchNorm affine into the Linear layer:
    #   out = (h_norm * gamma + beta) @ w_lin^T + b_lin
    #       =  h_norm @ (gamma * w_lin)^T + (beta . w_lin + b_lin)
    w_eff = p["gamma"] * p["w_lin"][0]                                  # (H,)
    b_eff = jnp.dot(p["beta"], p["w_lin"][0]) + p["b_lin"][0]           # scalar
    slab = slab.at[ROW_WEFF:ROW_WEFF + H, 0].set(w_eff)
    slab = slab.at[ROW_BEFF, 0].set(b_eff)
    return slab


def reference(x, p):
    """Pure-JAX reference of the same forward math (for correctness check)."""
    x = x.astype(jnp.float32)
    B, S, _ = x.shape
    H = HIDDEN
    w_ih_t = jnp.transpose(p["w_ih"])                   # (I, 4H)
    w_hh_t = jnp.transpose(p["w_hh"])                   # (H, 4H)
    b = (p["b_ih"] + p["b_hh"]).reshape(1, 4 * H)
    h = jnp.zeros((B, H), jnp.float32)
    c = jnp.zeros((B, H), jnp.float32)
    for t in range(S):
        gates = x[:, t, :] @ w_ih_t + h @ w_hh_t + b
        i_g = jax.nn.sigmoid(gates[:, 0 * H:1 * H])
        f_g = jax.nn.sigmoid(gates[:, 1 * H:2 * H])
        g_g = jnp.tanh(gates[:, 2 * H:3 * H])
        o_g = jax.nn.sigmoid(gates[:, 3 * H:4 * H])
        c = f_g * c + i_g * g_g
        h = o_g * jnp.tanh(c)
    mean = jnp.mean(h, axis=0, keepdims=True)
    var = jnp.mean((h - mean) ** 2, axis=0, keepdims=True)
    hbn = (h - mean) * lax.rsqrt(var + BN_EPS) * p["gamma"] + p["beta"]
    return hbn @ jnp.transpose(p["w_lin"]) + p["b_lin"]


if __name__ == "__main__":
    key = jax.random.PRNGKey(0)
    kx, kp = jax.random.split(key)

    B, S = 8, 8                                   # small shapes: batch=8, seq=8, features=3
    x = jax.random.normal(kx, (B, S, INPUT), jnp.float32)
    params = init_params(kp)
    slab = pack_params(params)

    out = sequence_model(x, slab)
    out = jax.block_until_ready(out)
    assert out.shape == (B, 1)

    ref = jax.block_until_ready(reference(x, params))
    np.testing.assert_allclose(np.asarray(out), np.asarray(ref), rtol=1e-4, atol=1e-4)

    print("KERNEL_OK")
</pallas_src>

<mosaic_0001>
module attributes {stable_mosaic.version = 11 : i64} {
  func.func @sequence_model_kernel(%arg0: memref<64x8xf32, #tpu.memory_space<vmem>>, %arg1: memref<56x512xf32, #tpu.memory_space<vmem>>, %arg2: memref<8x1xf32, #tpu.memory_space<vmem>>, %arg3: memref<64x512xf32, #tpu.memory_space<vmem>>) attributes {dimension_semantics = [], scalar_prefetch = 0 : i64, scratch_operands = 1 : i64, tpu.core_type = #tpu.core_type<tc>} {
    %c0 = arith.constant 0 : index
    %c0_0 = arith.constant 0 : index
    %0 = vector.load %arg0[%c0, %c0_0] : memref<64x8xf32, #tpu.memory_space<vmem>>, vector<64x8xf32>
    %c0_1 = arith.constant 0 : index
    %c0_2 = arith.constant 0 : index
    %1 = vector.load %arg1[%c0_1, %c0_2] : memref<56x512xf32, #tpu.memory_space<vmem>>, vector<8x512xf32>
    %cst = arith.constant dense<0.000000e+00> : vector<64x512xf32>
    %2 = tpu.matmul %0, %1, %cst {dimension_numbers = #tpu.dot_dimension_numbers<[1], [0], [0], [1], [0, 0, 1, 1], [], []>} : vector<64x8xf32>, vector<8x512xf32>, vector<64x512xf32> -> vector<64x512xf32>
    %c0_3 = arith.constant 0 : index
    %c0_4 = arith.constant 0 : index
    %3 = vector.load %arg3[%c0_3, %c0_4] : memref<64x512xf32, #tpu.memory_space<vmem>>, vector<64x512xf32>
    tpu.vector_store %arg3[%c0_3, %c0_4], %2 {strides = array<i32>} : memref<64x512xf32, #tpu.memory_space<vmem>>, vector<64x512xf32>,
    %c8 = arith.constant 8 : index
    %c0_5 = arith.constant 0 : index
    %4 = vector.load %arg1[%c8, %c0_5] : memref<56x512xf32, #tpu.memory_space<vmem>>, vector<20x512xf32>
    %cst_6 = arith.constant 0.000000e+00 : f32
    %5 = vector.broadcast %cst_6 : f32 to vector<8x20xf32>
    %cst_7 = arith.constant 0.000000e+00 : f32
    %6 = vector.broadcast %cst_7 : f32 to vector<8x20xf32>
    %c0_8 = arith.constant 0 : index
    %c0_9 = arith.constant 0 : index
    %7 = vector.load %arg3[%c0_8, %c0_9] : memref<64x512xf32, #tpu.memory_space<vmem>>, vector<8x512xf32>
    %cst_10 = arith.constant dense<0.000000e+00> : vector<8x512xf32>
    %8 = tpu.matmul %5, %4, %cst_10 {dimension_numbers = #tpu.dot_dimension_numbers<[1], [0], [0], [1], [0, 0, 1, 1], [], []>} : vector<8x20xf32>, vector<20x512xf32>, vector<8x512xf32> -> vector<8x512xf32>
    %9 = arith.addf %7, %8 : vector<8x512xf32>
    %10 = vector.extract_strided_slice %9 {offsets = [0, 0], sizes = [8, 20], strides = [1, 1]} : vector<8x512xf32> to vector<8x20xf32>
    %11 = arith.negf %10 : vector<8x20xf32>
    %12 = math.exp %11 : vector<8x20xf32>
    %cst_11 = arith.constant 1.000000e+00 : f32
    %13 = vector.broadcast %cst_11 : f32 to vector<8x20xf32>
    %14 = arith.addf %13, %12 : vector<8x20xf32>
    %15 = arith.divf %13, %14 : vector<8x20xf32>
    %16 = vector.extract_strided_slice %9 {offsets = [0, 128], sizes = [8, 20], strides = [1, 1]} : vector<8x512xf32> to vector<8x20xf32>
    %17 = arith.negf %16 : vector<8x20xf32>
    %18 = math.exp %17 : vector<8x20xf32>
    %cst_12 = arith.constant 1.000000e+00 : f32
    %19 = vector.broadcast %cst_12 : f32 to vector<8x20xf32>
    %20 = arith.addf %19, %18 : vector<8x20xf32>
    %21 = arith.divf %19, %20 : vector<8x20xf32>
    %22 = vector.extract_strided_slice %9 {offsets = [0, 256], sizes = [8, 20], strides = [1, 1]} : vector<8x512xf32> to vector<8x20xf32>
    %23 = math.tanh %22 : vector<8x20xf32>
    %24 = vector.extract_strided_slice %9 {offsets = [0, 384], sizes = [8, 20], strides = [1, 1]} : vector<8x512xf32> to vector<8x20xf32>
    %25 = arith.negf %24 : vector<8x20xf32>
    %26 = math.exp %25 : vector<8x20xf32>
    %cst_13 = arith.constant 1.000000e+00 : f32
    %27 = vector.broadcast %cst_13 : f32 to vector<8x20xf32>
    %28 = arith.addf %27, %26 : vector<8x20xf32>
    %29 = arith.divf %27, %28 : vector<8x20xf32>
    %30 = arith.mulf %21, %6 : vector<8x20xf32>
    %31 = arith.mulf %15, %23 : vector<8x20xf32>
    %32 = arith.addf %30, %31 : vector<8x20xf32>
    %33 = math.tanh %32 : vector<8x20xf32>
    %34 = arith.mulf %29, %33 : vector<8x20xf32>
    %c8_14 = arith.constant 8 : index
    %c0_15 = arith.constant 0 : index
    %35 = vector.load %arg3[%c8_14, %c0_15] : memref<64x512xf32, #tpu.memory_space<vmem>>, vector<8x512xf32>
    %cst_16 = arith.constant dense<0.000000e+00> : vector<8x512xf32>
    %36 = tpu.matmul %34, %4, %cst_16 {dimension_numbers = #tpu.dot_dimension_numbers<[1], [0], [0], [1], [0, 0, 1, 1], [], []>} : vector<8x20xf32>, vector<20x512xf32>, vector<8x512xf32> -> vector<8x512xf32>
    %37 = arith.addf %35, %36 : vector<8x512xf32>
    %38 = vector.extract_strided_slice %37 {offsets = [0, 0], sizes = [8, 20], strides = [1, 1]} : vector<8x512xf32> to vector<8x20xf32>
    %39 = arith.negf %38 : vector<8x20xf32>
    %40 = math.exp %39 : vector<8x20xf32>
    %cst_17 = arith.constant 1.000000e+00 : f32
    %41 = vector.broadcast %cst_17 : f32 to vector<8x20xf32>
    %42 = arith.addf %41, %40 : vector<8x20xf32>
    %43 = arith.divf %41, %42 : vector<8x20xf32>
    %44 = vector.extract_strided_slice %37 {offsets = [0, 128], sizes = [8, 20], strides = [1, 1]} : vector<8x512xf32> to vector<8x20xf32>
    %45 = arith.negf %44 : vector<8x20xf32>
    %46 = math.exp %45 : vector<8x20xf32>
    %cst_18 = arith.constant 1.000000e+00 : f32
    %47 = vector.broadcast %cst_18 : f32 to vector<8x20xf32>
    %48 = arith.addf %47, %46 : vector<8x20xf32>
    %49 = arith.divf %47, %48 : vector<8x20xf32>
    %50 = vector.extract_strided_slice %37 {offsets = [0, 256], sizes = [8, 20], strides = [1, 1]} : vector<8x512xf32> to vector<8x20xf32>
    %51 = math.tanh %50 : vector<8x20xf32>
    %52 = vector.extract_strided_slice %37 {offsets = [0, 384], sizes = [8, 20], strides = [1, 1]} : vector<8x512xf32> to vector<8x20xf32>
    %53 = arith.negf %52 : vector<8x20xf32>
    %54 = math.exp %53 : vector<8x20xf32>
    %cst_19 = arith.constant 1.000000e+00 : f32
    %55 = vector.broadcast %cst_19 : f32 to vector<8x20xf32>
    %56 = arith.addf %55, %54 : vector<8x20xf32>
    %57 = arith.divf %55, %56 : vector<8x20xf32>
    %58 = arith.mulf %49, %32 : vector<8x20xf32>
    %59 = arith.mulf %43, %51 : vector<8x20xf32>
    %60 = arith.addf %58, %59 : vector<8x20xf32>
    %61 = math.tanh %60 : vector<8x20xf32>
    %62 = arith.mulf %57, %61 : vector<8x20xf32>
    %c16 = arith.constant 16 : index
    %c0_20 = arith.constant 0 : index
    %63 = vector.load %arg3[%c16, %c0_20] : memref<64x512xf32, #tpu.memory_space<vmem>>, vector<8x512xf32>
    %cst_21 = arith.constant dense<0.000000e+00> : vector<8x512xf32>
    %64 = tpu.matmul %62, %4, %cst_21 {dimension_numbers = #tpu.dot_dimension_numbers<[1], [0], [0], [1], [0, 0, 1, 1], [], []>} : vector<8x20xf32>, vector<20x512xf32>, vector<8x512xf32> -> vector<8x512xf32>
    %65 = arith.addf %63, %64 : vector<8x512xf32>
    %66 = vector.extract_strided_slice %65 {offsets = [0, 0], sizes = [8, 20], strides = [1, 1]} : vector<8x512xf32> to vector<8x20xf32>
    %67 = arith.negf %66 : vector<8x20xf32>
    %68 = math.exp %67 : vector<8x20xf32>
    %cst_22 = arith.constant 1.000000e+00 : f32
    %69 = vector.broadcast %cst_22 : f32 to vector<8x20xf32>
    %70 = arith.addf %69, %68 : vector<8x20xf32>
    %71 = arith.divf %69, %70 : vector<8x20xf32>
    %72 = vector.extract_strided_slice %65 {offsets = [0, 128], sizes = [8, 20], strides = [1, 1]} : vector<8x512xf32> to vector<8x20xf32>
    %73 = arith.negf %72 : vector<8x20xf32>
    %74 = math.exp %73 : vector<8x20xf32>
    %cst_23 = arith.constant 1.000000e+00 : f32
    %75 = vector.broadcast %cst_23 : f32 to vector<8x20xf32>
    %76 = arith.addf %75, %74 : vector<8x20xf32>
    %77 = arith.divf %75, %76 : vector<8x20xf32>
    %78 = vector.extract_strided_slice %65 {offsets = [0, 256], sizes = [8, 20], strides = [1, 1]} : vector<8x512xf32> to vector<8x20xf32>
    %79 = math.tanh %78 : vector<8x20xf32>
    %80 = vector.extract_strided_slice %65 {offsets = [0, 384], sizes = [8, 20], strides = [1, 1]} : vector<8x512xf32> to vector<8x20xf32>
    %81 = arith.negf %80 : vector<8x20xf32>
    %82 = math.exp %81 : vector<8x20xf32>
    %cst_24 = arith.constant 1.000000e+00 : f32
    %83 = vector.broadcast %cst_24 : f32 to vector<8x20xf32>
    %84 = arith.addf %83, %82 : vector<8x20xf32>
    %85 = arith.divf %83, %84 : vector<8x20xf32>
    %86 = arith.mulf %77, %60 : vector<8x20xf32>
    %87 = arith.mulf %71, %79 : vector<8x20xf32>
    %88 = arith.addf %86, %87 : vector<8x20xf32>
    %89 = math.tanh %88 : vector<8x20xf32>
    %90 = arith.mulf %85, %89 : vector<8x20xf32>
    %c24 = arith.constant 24 : index
    %c0_25 = arith.constant 0 : index
    %91 = vector.load %arg3[%c24, %c0_25] : memref<64x512xf32, #tpu.memory_space<vmem>>, vector<8x512xf32>
    %cst_26 = arith.constant dense<0.000000e+00> : vector<8x512xf32>
    %92 = tpu.matmul %90, %4, %cst_26 {dimension_numbers = #tpu.dot_dimension_numbers<[1], [0], [0], [1], [0, 0, 1, 1], [], []>} : vector<8x20xf32>, vector<20x512xf32>, vector<8x512xf32> -> vector<8x512xf32>
    %93 = arith.addf %91, %92 : vector<8x512xf32>
    %94 = vector.extract_strided_slice %93 {offsets = [0, 0], sizes = [8, 20], strides = [1, 1]} : vector<8x512xf32> to vector<8x20xf32>
    %95 = arith.negf %94 : vector<8x20xf32>
    %96 = math.exp %95 : vector<8x20xf32>
    %cst_27 = arith.constant 1.000000e+00 : f32
    %97 = vector.broadcast %cst_27 : f32 to vector<8x20xf32>
    %98 = arith.addf %97, %96 : vector<8x20xf32>
    %99 = arith.divf %97, %98 : vector<8x20xf32>
    %100 = vector.extract_strided_slice %93 {offsets = [0, 128], sizes = [8, 20], strides = [1, 1]} : vector<8x512xf32> to vector<8x20xf32>
    %101 = arith.negf %100 : vector<8x20xf32>
    %102 = math.exp %101 : vector<8x20xf32>
    %cst_28 = arith.constant 1.000000e+00 : f32
    %103 = vector.broadcast %cst_28 : f32 to vector<8x20xf32>
    %104 = arith.addf %103, %102 : vector<8x20xf32>
    %105 = arith.divf %103, %104 : vector<8x20xf32>
    %106 = vector.extract_strided_slice %93 {offsets = [0, 256], sizes = [8, 20], strides = [1, 1]} : vector<8x512xf32> to vector<8x20xf32>
    %107 = math.tanh %106 : vector<8x20xf32>
    %108 = vector.extract_strided_slice %93 {offsets = [0, 384], sizes = [8, 20], strides = [1, 1]} : vector<8x512xf32> to vector<8x20xf32>
    %109 = arith.negf %108 : vector<8x20xf32>
    %110 = math.exp %109 : vector<8x20xf32>
    %cst_29 = arith.constant 1.000000e+00 : f32
    %111 = vector.broadcast %cst_29 : f32 to vector<8x20xf32>
    %112 = arith.addf %111, %110 : vector<8x20xf32>
    %113 = arith.divf %111, %112 : vector<8x20xf32>
    %114 = arith.mulf %105, %88 : vector<8x20xf32>
    %115 = arith.mulf %99, %107 : vector<8x20xf32>
    %116 = arith.addf %114, %115 : vector<8x20xf32>
    %117 = math.tanh %116 : vector<8x20xf32>
    %118 = arith.mulf %113, %117 : vector<8x20xf32>
    %c32 = arith.constant 32 : index
    %c0_30 = arith.constant 0 : index
    %119 = vector.load %arg3[%c32, %c0_30] : memref<64x512xf32, #tpu.memory_space<vmem>>, vector<8x512xf32>
    %cst_31 = arith.constant dense<0.000000e+00> : vector<8x512xf32>
    %120 = tpu.matmul %118, %4, %cst_31 {dimension_numbers = #tpu.dot_dimension_numbers<[1], [0], [0], [1], [0, 0, 1, 1], [], []>} : vector<8x20xf32>, vector<20x512xf32>, vector<8x512xf32> -> vector<8x512xf32>
    %121 = arith.addf %119, %120 : vector<8x512xf32>
    %122 = vector.extract_strided_slice %121 {offsets = [0, 0], sizes = [8, 20], strides = [1, 1]} : vector<8x512xf32> to vector<8x20xf32>
    %123 = arith.negf %122 : vector<8x20xf32>
    %124 = math.exp %123 : vector<8x20xf32>
    %cst_32 = arith.constant 1.000000e+00 : f32
    %125 = vector.broadcast %cst_32 : f32 to vector<8x20xf32>
    %126 = arith.addf %125, %124 : vector<8x20xf32>
    %127 = arith.divf %125, %126 : vector<8x20xf32>
    %128 = vector.extract_strided_slice %121 {offsets = [0, 128], sizes = [8, 20], strides = [1, 1]} : vector<8x512xf32> to vector<8x20xf32>
    %129 = arith.negf %128 : vector<8x20xf32>
    %130 = math.exp %129 : vector<8x20xf32>
    %cst_33 = arith.constant 1.000000e+00 : f32
    %131 = vector.broadcast %cst_33 : f32 to vector<8x20xf32>
    %132 = arith.addf %131, %130 : vector<8x20xf32>
    %133 = arith.divf %131, %132 : vector<8x20xf32>
    %134 = vector.extract_strided_slice %121 {offsets = [0, 256], sizes = [8, 20], strides = [1, 1]} : vector<8x512xf32> to vector<8x20xf32>
    %135 = math.tanh %134 : vector<8x20xf32>
    %136 = vector.extract_strided_slice %121 {offsets = [0, 384], sizes = [8, 20], strides = [1, 1]} : vector<8x512xf32> to vector<8x20xf32>
    %137 = arith.negf %136 : vector<8x20xf32>
    %138 = math.exp %137 : vector<8x20xf32>
    %cst_34 = arith.constant 1.000000e+00 : f32
    %139 = vector.broadcast %cst_34 : f32 to vector<8x20xf32>
    %140 = arith.addf %139, %138 : vector<8x20xf32>
    %141 = arith.divf %139, %140 : vector<8x20xf32>
    %142 = arith.mulf %133, %116 : vector<8x20xf32>
    %143 = arith.mulf %127, %135 : vector<8x20xf32>
    %144 = arith.addf %142, %143 : vector<8x20xf32>
    %145 = math.tanh %144 : vector<8x20xf32>
    %146 = arith.mulf %141, %145 : vector<8x20xf32>
    %c40 = arith.constant 40 : index
    %c0_35 = arith.constant 0 : index
    %147 = vector.load %arg3[%c40, %c0_35] : memref<64x512xf32, #tpu.memory_space<vmem>>, vector<8x512xf32>
    %cst_36 = arith.constant dense<0.000000e+00> : vector<8x512xf32>
    %148 = tpu.matmul %146, %4, %cst_36 {dimension_numbers = #tpu.dot_dimension_numbers<[1], [0], [0], [1], [0, 0, 1, 1], [], []>} : vector<8x20xf32>, vector<20x512xf32>, vector<8x512xf32> -> vector<8x512xf32>
    %149 = arith.addf %147, %148 : vector<8x512xf32>
    %150 = vector.extract_strided_slice %149 {offsets = [0, 0], sizes = [8, 20], strides = [1, 1]} : vector<8x512xf32> to vector<8x20xf32>
    %151 = arith.negf %150 : vector<8x20xf32>
    %152 = math.exp %151 : vector<8x20xf32>
    %cst_37 = arith.constant 1.000000e+00 : f32
    %153 = vector.broadcast %cst_37 : f32 to vector<8x20xf32>
    %154 = arith.addf %153, %152 : vector<8x20xf32>
    %155 = arith.divf %153, %154 : vector<8x20xf32>
    %156 = vector.extract_strided_slice %149 {offsets = [0, 128], sizes = [8, 20], strides = [1, 1]} : vector<8x512xf32> to vector<8x20xf32>
    %157 = arith.negf %156 : vector<8x20xf32>
    %158 = math.exp %157 : vector<8x20xf32>
    %cst_38 = arith.constant 1.000000e+00 : f32
    %159 = vector.broadcast %cst_38 : f32 to vector<8x20xf32>
    %160 = arith.addf %159, %158 : vector<8x20xf32>
    %161 = arith.divf %159, %160 : vector<8x20xf32>
    %162 = vector.extract_strided_slice %149 {offsets = [0, 256], sizes = [8, 20], strides = [1, 1]} : vector<8x512xf32> to vector<8x20xf32>
    %163 = math.tanh %162 : vector<8x20xf32>
    %164 = vector.extract_strided_slice %149 {offsets = [0, 384], sizes = [8, 20], strides = [1, 1]} : vector<8x512xf32> to vector<8x20xf32>
    %165 = arith.negf %164 : vector<8x20xf32>
    %166 = math.exp %165 : vector<8x20xf32>
    %cst_39 = arith.constant 1.000000e+00 : f32
    %167 = vector.broadcast %cst_39 : f32 to vector<8x20xf32>
    %168 = arith.addf %167, %166 : vector<8x20xf32>
    %169 = arith.divf %167, %168 : vector<8x20xf32>
    %170 = arith.mulf %161, %144 : vector<8x20xf32>
    %171 = arith.mulf %155, %163 : vector<8x20xf32>
    %172 = arith.addf %170, %171 : vector<8x20xf32>
    %173 = math.tanh %172 : vector<8x20xf32>
    %174 = arith.mulf %169, %173 : vector<8x20xf32>
    %c48 = arith.constant 48 : index
    %c0_40 = arith.constant 0 : index
    %175 = vector.load %arg3[%c48, %c0_40] : memref<64x512xf32, #tpu.memory_space<vmem>>, vector<8x512xf32>
    %cst_41 = arith.constant dense<0.000000e+00> : vector<8x512xf32>
    %176 = tpu.matmul %174, %4, %cst_41 {dimension_numbers = #tpu.dot_dimension_numbers<[1], [0], [0], [1], [0, 0, 1, 1], [], []>} : vector<8x20xf32>, vector<20x512xf32>, vector<8x512xf32> -> vector<8x512xf32>
    %177 = arith.addf %175, %176 : vector<8x512xf32>
    %178 = vector.extract_strided_slice %177 {offsets = [0, 0], sizes = [8, 20], strides = [1, 1]} : vector<8x512xf32> to vector<8x20xf32>
    %179 = arith.negf %178 : vector<8x20xf32>
    %180 = math.exp %179 : vector<8x20xf32>
    %cst_42 = arith.constant 1.000000e+00 : f32
    %181 = vector.broadcast %cst_42 : f32 to vector<8x20xf32>
    %182 = arith.addf %181, %180 : vector<8x20xf32>
    %183 = arith.divf %181, %182 : vector<8x20xf32>
    %184 = vector.extract_strided_slice %177 {offsets = [0, 128], sizes = [8, 20], strides = [1, 1]} : vector<8x512xf32> to vector<8x20xf32>
    %185 = arith.negf %184 : vector<8x20xf32>
    %186 = math.exp %185 : vector<8x20xf32>
    %cst_43 = arith.constant 1.000000e+00 : f32
    %187 = vector.broadcast %cst_43 : f32 to vector<8x20xf32>
    %188 = arith.addf %187, %186 : vector<8x20xf32>
    %189 = arith.divf %187, %188 : vector<8x20xf32>
    %190 = vector.extract_strided_slice %177 {offsets = [0, 256], sizes = [8, 20], strides = [1, 1]} : vector<8x512xf32> to vector<8x20xf32>
    %191 = math.tanh %190 : vector<8x20xf32>
    %192 = vector.extract_strided_slice %177 {offsets = [0, 384], sizes = [8, 20], strides = [1, 1]} : vector<8x512xf32> to vector<8x20xf32>
    %193 = arith.negf %192 : vector<8x20xf32>
    %194 = math.exp %193 : vector<8x20xf32>
    %cst_44 = arith.constant 1.000000e+00 : f32
    %195 = vector.broadcast %cst_44 : f32 to vector<8x20xf32>
    %196 = arith.addf %195, %194 : vector<8x20xf32>
    %197 = arith.divf %195, %196 : vector<8x20xf32>
    %198 = arith.mulf %189, %172 : vector<8x20xf32>
    %199 = arith.mulf %183, %191 : vector<8x20xf32>
    %200 = arith.addf %198, %199 : vector<8x20xf32>
    %201 = math.tanh %200 : vector<8x20xf32>
    %202 = arith.mulf %197, %201 : vector<8x20xf32>
    %c56 = arith.constant 56 : index
    %c0_45 = arith.constant 0 : index
    %203 = vector.load %arg3[%c56, %c0_45] : memref<64x512xf32, #tpu.memory_space<vmem>>, vector<8x512xf32>
    %cst_46 = arith.constant dense<0.000000e+00> : vector<8x512xf32>
    %204 = tpu.matmul %202, %4, %cst_46 {dimension_numbers = #tpu.dot_dimension_numbers<[1], [0], [0], [1], [0, 0, 1, 1], [], []>} : vector<8x20xf32>, vector<20x512xf32>, vector<8x512xf32> -> vector<8x512xf32>
    %205 = arith.addf %203, %204 : vector<8x512xf32>
    %206 = vector.extract_strided_slice %205 {offsets = [0, 0], sizes = [8, 20], strides = [1, 1]} : vector<8x512xf32> to vector<8x20xf32>
    %207 = arith.negf %206 : vector<8x20xf32>
    %208 = math.exp %207 : vector<8x20xf32>
    %cst_47 = arith.constant 1.000000e+00 : f32
    %209 = vector.broadcast %cst_47 : f32 to vector<8x20xf32>
    %210 = arith.addf %209, %208 : vector<8x20xf32>
    %211 = arith.divf %209, %210 : vector<8x20xf32>
    %212 = vector.extract_strided_slice %205 {offsets = [0, 128], sizes = [8, 20], strides = [1, 1]} : vector<8x512xf32> to vector<8x20xf32>
    %213 = arith.negf %212 : vector<8x20xf32>
    %214 = math.exp %213 : vector<8x20xf32>
    %cst_48 = arith.constant 1.000000e+00 : f32
    %215 = vector.broadcast %cst_48 : f32 to vector<8x20xf32>
    %216 = arith.addf %215, %214 : vector<8x20xf32>
    %217 = arith.divf %215, %216 : vector<8x20xf32>
    %218 = vector.extract_strided_slice %205 {offsets = [0, 256], sizes = [8, 20], strides = [1, 1]} : vector<8x512xf32> to vector<8x20xf32>
    %219 = math.tanh %218 : vector<8x20xf32>
    %220 = vector.extract_strided_slice %205 {offsets = [0, 384], sizes = [8, 20], strides = [1, 1]} : vector<8x512xf32> to vector<8x20xf32>
    %221 = arith.negf %220 : vector<8x20xf32>
    %222 = math.exp %221 : vector<8x20xf32>
    %cst_49 = arith.constant 1.000000e+00 : f32
    %223 = vector.broadcast %cst_49 : f32 to vector<8x20xf32>
    %224 = arith.addf %223, %222 : vector<8x20xf32>
    %225 = arith.divf %223, %224 : vector<8x20xf32>
    %226 = arith.mulf %217, %200 : vector<8x20xf32>
    %227 = arith.mulf %211, %219 : vector<8x20xf32>
    %228 = arith.addf %226, %227 : vector<8x20xf32>
    %229 = math.tanh %228 : vector<8x20xf32>
    %230 = arith.mulf %225, %229 : vector<8x20xf32>
    %cst_50 = arith.constant dense<0.000000e+00> : vector<20xf32>
    %231 = vector.multi_reduction <add>, %230, %cst_50 [0] : vector<8x20xf32> to vector<20xf32>
    %232 = vector.shape_cast %231 : vector<20xf32> to vector<1x20xf32>
    %cst_51 = arith.constant 8.000000e+00 : f32
    %233 = vector.broadcast %cst_51 : f32 to vector<1x20xf32>
    %234 = arith.divf %232, %233 : vector<1x20xf32>
    %235 = arith.mulf %230, %230 : vector<8x20xf32>
    %cst_52 = arith.constant dense<0.000000e+00> : vector<20xf32>
    %236 = vector.multi_reduction <add>, %235, %cst_52 [0] : vector<8x20xf32> to vector<20xf32>
    %237 = vector.shape_cast %236 : vector<20xf32> to vector<1x20xf32>
    %cst_53 = arith.constant 8.000000e+00 : f32
    %238 = vector.broadcast %cst_53 : f32 to vector<1x20xf32>
    %239 = arith.divf %237, %238 : vector<1x20xf32>
    %240 = arith.mulf %234, %234 : vector<1x20xf32>
    %241 = arith.subf %239, %240 : vector<1x20xf32>
    %242 = vector.broadcast %234 : vector<1x20xf32> to vector<8x20xf32>
    %243 = arith.subf %230, %242 : vector<8x20xf32>
    %cst_54 = arith.constant 9.99999974E-6 : f32
    %244 = vector.broadcast %cst_54 : f32 to vector<1x20xf32>
    %245 = arith.addf %241, %244 : vector<1x20xf32>
    %246 = math.rsqrt %245 : vector<1x20xf32>
    %247 = vector.broadcast %246 : vector<1x20xf32> to vector<8x20xf32>
    %248 = arith.mulf %243, %247 : vector<8x20xf32>
    %c32_55 = arith.constant 32 : index
    %c0_56 = arith.constant 0 : index
    %249 = vector.load %arg1[%c32_55, %c0_56] : memref<56x512xf32, #tpu.memory_space<vmem>>, vector<20x1xf32>
    %c52 = arith.constant 52 : index
    %c0_57 = arith.constant 0 : index
    %250 = vector.load %arg1[%c52, %c0_57] : memref<56x512xf32, #tpu.memory_space<vmem>>, vector<1x1xf32>
    %cst_58 = arith.constant dense<0.000000e+00> : vector<8x1xf32>
    %251 = tpu.matmul %248, %249, %cst_58 {dimension_numbers = #tpu.dot_dimension_numbers<[1], [0], [0], [1], [0, 0, 1, 1], [], []>} : vector<8x20xf32>, vector<20x1xf32>, vector<8x1xf32> -> vector<8x1xf32>
    %252 = vector.broadcast %250 : vector<1x1xf32> to vector<8x1xf32>
    %253 = arith.addf %251, %252 : vector<8x1xf32>
    %c0_59 = arith.constant 0 : index
    %c0_60 = arith.constant 0 : index
    %254 = vector.load %arg2[%c0_59, %c0_60] : memref<8x1xf32, #tpu.memory_space<vmem>>, vector<8x1xf32>
    tpu.vector_store %arg2[%c0_59, %c0_60], %253 {strides = array<i32>} : memref<8x1xf32, #tpu.memory_space<vmem>>, vector<8x1xf32>,
    return
  }
}

</mosaic_0001>

<llo_original>
// kernel: tpu_custom_call.1
$region0: #{tpu_custom_call.1}
  #allocation0 [shape = 'u32[]', space=smem, size = 0x4, offset = 0x4, fixed_abs, tag = 'smem constant byte address 0x4 - core index']
  #allocation1 [shape = 'u32[144,128]{1,0:T(1,128)}', space=vmem, size = 0x12000, scoped, tag = 'internal scratch']
  #allocation2 [shape = 'f32[64,512]{1,0:T(8,128)}', space=vmem, size = 0x20000, scoped, tag = 'scratch operand']
  %s0 = inlined_call_operand.vmem [shape: f32[64,8], index: 0, kind: input, shape index: {}]
  %s1 = inlined_call_operand.hbm [shape: f32[56,512], index: 1, kind: input, shape index: {}]
  %s2 = inlined_call_operand.vmem [shape: f32[8,1], index: 2, kind: output, shape index: {}]
  %s3 = sld [smem:[#allocation0]]
  $region22: #{tpu_custom_call.1} parent=0
    _
  %s5 = ssub.s32 1, %s3
  %s6 = scalar_select 0, %s5, %s3
  $region1: #{tpu_custom_call.1} parent=0
    #allocation3 [shape = 'u8[114688]{0}', space=vmem, size = 0x1c000, scoped, tag = 'input window, operand 1, single buffered']
    #allocation4 [shape = 's32[1]{0}', space=sflag, size = 0x4, scoped, tag = 'scoped memory for tpu_custom_call.1']
    %7 = vsyncpa [#allocation4], 0
    // Predicated region
    $region2: #{tpu_custom_call.1} parent=1 // pred_check
      _
    $region3: #{tpu_custom_call.1} parent=1 // pred_check_branch
      %9 = sbr.rel (0) target = $region5
    $region4: #{tpu_custom_call.1} parent=1 // pred_region
      _
    $region5: #{tpu_custom_call.1} parent=1 // pred_fallthru
      _
    // Predicated region
    $region6: #{tpu_custom_call.1} parent=1 // pred_check
      _
    $region7: #{tpu_custom_call.1} parent=1 // pred_check_branch
      %11 = sbr.rel (0) target = $region9
    $region8: #{tpu_custom_call.1} parent=1 // pred_region
      %s13 = ssub.s32 3584, 3584
      %14 = vsyncadd [#allocation4], %s13
      %s15 = sshll.u32 [#allocation3], 4
      %s16 = int_to_ptr.vmem [resolvable:$true] %s15
      %21 = dma.hbm_to_vmem [thread:$0]  %s1, 3584, %s16, [#allocation4], 512, 512, 32
    $region9: #{tpu_custom_call.1} parent=1 // pred_fallthru
      _
    // Predicated region
    $region10: #{tpu_custom_call.1} parent=1 // pred_check
      _
    $region11: #{tpu_custom_call.1} parent=1 // pred_check_branch
      %23 = sbr.rel (0) target = $region13
    $region12: #{tpu_custom_call.1} parent=1 // pred_region
      %24 = dma.done [#allocation4], 3584
    $region13: #{tpu_custom_call.1} parent=1 // pred_fallthru
      _
    %v25 = vld [vmem:[%s0] sm:$0xff]
    %v26 = vld [vmem:[%s0 + $0x8] sm:$0xff]
    %v27 = vld [vmem:[%s0 + $0x10] sm:$0xff]
    %v28 = vld [vmem:[%s0 + $0x18] sm:$0xff]
    %v29 = vld [vmem:[%s0 + $0x20] sm:$0xff]
    %v30 = vld [vmem:[%s0 + $0x28] sm:$0xff]
    %v31 = vld [vmem:[%s0 + $0x30] sm:$0xff]
    %v32 = vld [vmem:[%s0 + $0x38] sm:$0xff]
    %v33 = vld [vmem:[#allocation3] sm:$0xff]
    %v34 = vld [vmem:[#allocation3 + $0x8] sm:$0xff]
    %v35 = vld [vmem:[#allocation3 + $0x10] sm:$0xff]
    %v36 = vld [vmem:[#allocation3 + $0x18] sm:$0xff]
    %vm37 = vcmask 64512
    %v39 = vsel %vm37, %v25, 0
    %v42 = vsel %vm37, %v26, 0
    %v45 = vsel %vm37, %v27, 0
    %v48 = vsel %vm37, %v28, 0
    %v51 = vsel %vm37, %v29, 0
    %v54 = vsel %vm37, %v30, 0
    %v57 = vsel %vm37, %v31, 0
    %v60 = vsel %vm37, %v32, 0
    %62 = vmatprep.subr.mxu0 0.0
    %63 = vmatpush1.msra.mxu0 0.0
    %64 = vmatprep.subr.mxu0 0.0
    %65 = vmatpush1.msra.mxu0 0.0
    %66 = vmatprep.subr.mxu0 0.0
    %67 = vmatpush1.msra.mxu0 0.0
    %68 = vmatprep.subr.mxu0 0.0
    %69 = vmatpush1.msra.mxu0 0.0
    %70 = vmatprep.subr.mxu0 0.0
    %71 = vmatpush1.msra.mxu0 0.0
    %72 = vmatprep.subr.mxu0 0.0
    %73 = vmatpush1.msra.mxu0 0.0
    %74 = vmatprep.subr.mxu0 0.0
    %75 = vmatpush1.msra.mxu0 0.0
    %76 = vmatprep.subr.mxu0 0.0
    %77 = vmatpush1.msra.mxu0 0.0
    %78 = vmatprep.subr.mxu0 0.0
    %79 = vmatpush1.msra.mxu0 0.0
    %80 = vmatprep.subr.mxu0 0.0
    %81 = vmatpush1.msra.mxu0 0.0
    %82 = vmatprep.subr.mxu0 0.0
    %83 = vmatpush1.msra.mxu0 0.0
    %84 = vmatprep.subr.mxu0 0.0
    %85 = vmatpush1.msra.mxu0 0.0
    %86 = vmatprep.subr.mxu0 0.0
    %87 = vmatpush1.msra.mxu0 0.0
    %88 = vmatprep.subr.mxu0 0.0
    %89 = vmatpush1.msra.mxu0 0.0
    %90 = vmatprep.subr.mxu0 0.0
    %91 = vmatpush1.msra.mxu0 0.0
    %92 = vmatprep.subr.mxu0 %v34
    %93 = vmatpush1.msra.mxu0 %v33
    %94 = vmatprep.subr.mxu0 0.0
    %95 = vmatpush2.msra.mxu0 0.0
    %96 = vmatprep.subr.mxu0 0.0
    %97 = vmatpush2.msra.mxu0 0.0
    %98 = vmatprep.subr.mxu0 0.0
    %99 = vmatpush2.msra.mxu0 0.0
    %100 = vmatprep.subr.mxu0 0.0
    %101 = vmatpush2.msra.mxu0 0.0
    %102 = vmatprep.subr.mxu0 0.0
    %103 = vmatpush2.msra.mxu0 0.0
    %104 = vmatprep.subr.mxu0 0.0
    %105 = vmatpush2.msra.mxu0 0.0
    %106 = vmatprep.subr.mxu0 0.0
    %107 = vmatpush2.msra.mxu0 0.0
    %108 = vmatprep.subr.mxu0 0.0
    %109 = vmatpush2.msra.mxu0 0.0
    %110 = vmatprep.subr.mxu0 0.0
    %111 = vmatpush2.msra.mxu0 0.0
    %112 = vmatprep.subr.mxu0 0.0
    %113 = vmatpush2.msra.mxu0 0.0
    %114 = vmatprep.subr.mxu0 0.0
    %115 = vmatpush2.msra.mxu0 0.0
    %116 = vmatprep.subr.mxu0 0.0
    %117 = vmatpush2.msra.mxu0 0.0
    %118 = vmatprep.subr.mxu0 0.0
    %119 = vmatpush2.msra.mxu0 0.0
    %120 = vmatprep.subr.mxu0 0.0
    %121 = vmatpush2.msra.mxu0 0.0
    %122 = vmatprep.subr.mxu0 0.0
    %123 = vmatpush2.msra.mxu0 0.0
    %124 = vmatprep.subr.mxu0 0.0
    %125 = vmatpush2.msra.mxu0 0.0
    %126 = vmatprep.mubr.f32.mxu0 0.0
    %127 = vmatmul.mubr.f32.gmra.mxu0 %v39
    %v128 = vpop.f32.mrf.mxu0
    %v129 = vadd.f32 0.0, %v128
    %v130 = vpop.f32.mrf.mxu0
    %v131 = vadd.f32 0.0, %v130
    %132 = vmatprep.mubr.f32.mxu0 0.0
    %133 = vmatmul.mubr.f32.gmra.mxu0 %v42
    %v134 = vpop.f32.mrf.mxu0
    %v135 = vadd.f32 0.0, %v134
    %v136 = vpop.f32.mrf.mxu0
    %v137 = vadd.f32 0.0, %v136
    %138 = vmatprep.mubr.f32.mxu0 0.0
    %139 = vmatmul.mubr.f32.gmra.mxu0 %v45
    %v140 = vpop.f32.mrf.mxu0
    %v141 = vadd.f32 0.0, %v140
    %v142 = vpop.f32.mrf.mxu0
    %v143 = vadd.f32 0.0, %v142
    %144 = vmatprep.mubr.f32.mxu0 0.0
    %145 = vmatmul.mubr.f32.gmra.mxu0 %v48
    %v146 = vpop.f32.mrf.mxu0
    %v147 = vadd.f32 0.0, %v146
    %v148 = vpop.f32.mrf.mxu0
    %v149 = vadd.f32 0.0, %v148
    %150 = vmatprep.mubr.f32.mxu0 0.0
    %151 = vmatmul.mubr.f32.gmra.mxu0 %v51
    %v152 = vpop.f32.mrf.mxu0
    %v153 = vadd.f32 0.0, %v152
    %v154 = vpop.f32.mrf.mxu0
    %v155 = vadd.f32 0.0, %v154
    %156 = vmatprep.mubr.f32.mxu0 0.0
    %157 = vmatmul.mubr.f32.gmra.mxu0 %v54
    %v158 = vpop.f32.mrf.mxu0
    %v159 = vadd.f32 0.0, %v158
    %v160 = vpop.f32.mrf.mxu0
    %v161 = vadd.f32 0.0, %v160
    %162 = vmatprep.mubr.f32.mxu0 0.0
    %163 = vmatmul.mubr.f32.gmra.mxu0 %v57
    %v164 = vpop.f32.mrf.mxu0
    %v165 = vadd.f32 0.0, %v164
    %v166 = vpop.f32.mrf.mxu0
    %v167 = vadd.f32 0.0, %v166
    %168 = vmatprep.mubr.f32.mxu0 0.0
    %169 = vmatmul.mubr.f32.gmra.mxu0 %v60
    %v170 = vpop.f32.mrf.mxu0
    %v171 = vadd.f32 0.0, %v170
    %v172 = vpop.f32.mrf.mxu0
    %v173 = vadd.f32 0.0, %v172
    %174 = vdwg.mxu0
    %175 = vmatprep.subr.mxu0 0.0
    %176 = vmatpush1.msra.mxu0 0.0
    %177 = vmatprep.subr.mxu0 0.0
    %178 = vmatpush1.msra.mxu0 0.0
    %179 = vmatprep.subr.mxu0 0.0
    %180 = vmatpush1.msra.mxu0 0.0
    %181 = vmatprep.subr.mxu0 0.0
    %182 = vmatpush1.msra.mxu0 0.0
    %183 = vmatprep.subr.mxu0 0.0
    %184 = vmatpush1.msra.mxu0 0.0
    %185 = vmatprep.subr.mxu0 0.0
    %186 = vmatpush1.msra.mxu0 0.0
    %187 = vmatprep.subr.mxu0 0.0
    %188 = vmatpush1.msra.mxu0 0.0
    %189 = vmatprep.subr.mxu0 0.0
    %190 = vmatpush1.msra.mxu0 0.0
    %191 = vmatprep.subr.mxu0 0.0
    %192 = vmatpush1.msra.mxu0 0.0
    %193 = vmatprep.subr.mxu0 0.0
    %194 = vmatpush1.msra.mxu0 0.0
    %195 = vmatprep.subr.mxu0 0.0
    %196 = vmatpush1.msra.mxu0 0.0
    %197 = vmatprep.subr.mxu0 0.0
    %198 = vmatpush1.msra.mxu0 0.0
    %199 = vmatprep.subr.mxu0 0.0
    %200 = vmatpush1.msra.mxu0 0.0
    %201 = vmatprep.subr.mxu0 0.0
    %202 = vmatpush1.msra.mxu0 0.0
    %203 = vmatprep.subr.mxu0 0.0
    %204 = vmatpush1.msra.mxu0 0.0
    %205 = vmatprep.subr.mxu0 %v36
    %206 = vmatpush1.msra.mxu0 %v35
    %207 = vmatprep.subr.mxu0 0.0
    %208 = vmatpush2.msra.mxu0 0.0
    %209 = vmatprep.subr.mxu0 0.0
    %210 = vmatpush2.msra.mxu0 0.0
    %211 = vmatprep.subr.mxu0 0.0
    %212 = vmatpush2.msra.mxu0 0.0
    %213 = vmatprep.subr.mxu0 0.0
    %214 = vmatpush2.msra.mxu0 0.0
    %215 = vmatprep.subr.mxu0 0.0
    %216 = vmatpush2.msra.mxu0 0.0
    %217 = vmatprep.subr.mxu0 0.0
    %218 = vmatpush2.msra.mxu0 0.0
    %219 = vmatprep.subr.mxu0 0.0
    %220 = vmatpush2.msra.mxu0 0.0
    %221 = vmatprep.subr.mxu0 0.0
    %222 = vmatpush2.msra.mxu0 0.0
    %223 = vmatprep.subr.mxu0 0.0
    %224 = vmatpush2.msra.mxu0 0.0
    %225 = vmatprep.subr.mxu0 0.0
    %226 = vmatpush2.msra.mxu0 0.0
    %227 = vmatprep.subr.mxu0 0.0
    %228 = vmatpush2.msra.mxu0 0.0
    %229 = vmatprep.subr.mxu0 0.0
    %230 = vmatpush2.msra.mxu0 0.0
    %231 = vmatprep.subr.mxu0 0.0
    %232 = vmatpush2.msra.mxu0 0.0
    %233 = vmatprep.subr.mxu0 0.0
    %234 = vmatpush2.msra.mxu0 0.0
    %235 = vmatprep.subr.mxu0 0.0
    %236 = vmatpush2.msra.mxu0 0.0
    %237 = vmatprep.subr.mxu0 0.0
    %238 = vmatpush2.msra.mxu0 0.0
    %239 = vmatprep.mubr.f32.mxu0 0.0
    %240 = vmatmul.mubr.f32.gmra.mxu0 %v39
    %v241 = vpop.f32.mrf.mxu0
    %v242 = vadd.f32 0.0, %v241
    %v243 = vpop.f32.mrf.mxu0
    %v244 = vadd.f32 0.0, %v243
    %245 = vmatprep.mubr.f32.mxu0 0.0
    %246 = vmatmul.mubr.f32.gmra.mxu0 %v42
    %v247 = vpop.f32.mrf.mxu0
    %v248 = vadd.f32 0.0, %v247
    %v249 = vpop.f32.mrf.mxu0
    %v250 = vadd.f32 0.0, %v249
    %251 = vmatprep.mubr.f32.mxu0 0.0
    %252 = vmatmul.mubr.f32.gmra.mxu0 %v45
    %v253 = vpop.f32.mrf.mxu0
    %v254 = vadd.f32 0.0, %v253
    %v255 = vpop.f32.mrf.mxu0
    %v256 = vadd.f32 0.0, %v255
    %257 = vmatprep.mubr.f32.mxu0 0.0
    %258 = vmatmul.mubr.f32.gmra.mxu0 %v48
    %v259 = vpop.f32.mrf.mxu0
    %v260 = vadd.f32 0.0, %v259
    %v261 = vpop.f32.mrf.mxu0
    %v262 = vadd.f32 0.0, %v261
    %263 = vmatprep.mubr.f32.mxu0 0.0
    %264 = vmatmul.mubr.f32.gmra.mxu0 %v51
    %v265 = vpop.f32.mrf.mxu0
    %v266 = vadd.f32 0.0, %v265
    %v267 = vpop.f32.mrf.mxu0
    %v268 = vadd.f32 0.0, %v267
    %269 = vmatprep.mubr.f32.mxu0 0.0
    %270 = vmatmul.mubr.f32.gmra.mxu0 %v54
    %v271 = vpop.f32.mrf.mxu0
    %v272 = vadd.f32 0.0, %v271
    %v273 = vpop.f32.mrf.mxu0
    %v274 = vadd.f32 0.0, %v273
    %275 = vmatprep.mubr.f32.mxu0 0.0
    %276 = vmatmul.mubr.f32.gmra.mxu0 %v57
    %v277 = vpop.f32.mrf.mxu0
    %v278 = vadd.f32 0.0, %v277
    %v279 = vpop.f32.mrf.mxu0
    %v280 = vadd.f32 0.0, %v279
    %281 = vmatprep.mubr.f32.mxu0 0.0
    %282 = vmatmul.mubr.f32.gmra.mxu0 %v60
    %v283 = vpop.f32.mrf.mxu0
    %v284 = vadd.f32 0.0, %v283
    %v285 = vpop.f32.mrf.mxu0
    %v286 = vadd.f32 0.0, %v285
    %287 = vdwg.mxu0
    %288 = vst [vmem:[#allocation2] sm:$0xff] %v129
    %289 = vst [vmem:[#allocation2 + $0x8] sm:$0xff] %v131
    %290 = vst [vmem:[#allocation2 + $0x10] sm:$0xff] %v242
    %291 = vst [vmem:[#allocation2 + $0x18] sm:$0xff] %v244
    %292 = vst [vmem:[#allocation2 + $0x20] sm:$0xff] %v135
    %293 = vst [vmem:[#allocation2 + $0x28] sm:$0xff] %v137
    %294 = vst [vmem:[#allocation2 + $0x30] sm:$0xff] %v248
    %295 = vst [vmem:[#allocation2 + $0x38] sm:$0xff] %v250
    %296 = vst [vmem:[#allocation2 + $0x40] sm:$0xff] %v141
    %297 = vst [vmem:[#allocation2 + $0x48] sm:$0xff] %v143
    %298 = vst [vmem:[#allocation2 + $0x50] sm:$0xff] %v254
    %299 = vst [vmem:[#allocation2 + $0x58] sm:$0xff] %v256
    %300 = vst [vmem:[#allocation2 + $0x60] sm:$0xff] %v147
    %301 = vst [vmem:[#allocation2 + $0x68] sm:$0xff] %v149
    %302 = vst [vmem:[#allocation2 + $0x70] sm:$0xff] %v260
    %303 = vst [vmem:[#allocation2 + $0x78] sm:$0xff] %v262
    %304 = vst [vmem:[#allocation2 + $0x80] sm:$0xff] %v153
    %305 = vst [vmem:[#allocation2 + $0x88] sm:$0xff] %v155
    %306 = vst [vmem:[#allocation2 + $0x90] sm:$0xff] %v266
    %307 = vst [vmem:[#allocation2 + $0x98] sm:$0xff] %v268
    %308 = vst [vmem:[#allocation2 + $0xa0] sm:$0xff] %v159
    %309 = vst [vmem:[#allocation2 + $0xa8] sm:$0xff] %v161
    %310 = vst [vmem:[#allocation2 + $0xb0] sm:$0xff] %v272
    %311 = vst [vmem:[#allocation2 + $0xb8] sm:$0xff] %v274
    %312 = vst [vmem:[#allocation2 + $0xc0] sm:$0xff] %v165
    %313 = vst [vmem:[#allocation2 + $0xc8] sm:$0xff] %v167
    %314 = vst [vmem:[#allocation2 + $0xd0] sm:$0xff] %v278
    %315 = vst [vmem:[#allocation2 + $0xd8] sm:$0xff] %v280
    %316 = vst [vmem:[#allocation2 + $0xe0] sm:$0xff] %v171
    %317 = vst [vmem:[#allocation2 + $0xe8] sm:$0xff] %v173
    %318 = vst [vmem:[#allocation2 + $0xf0] sm:$0xff] %v284
    %319 = vst [vmem:[#allocation2 + $0xf8] sm:$0xff] %v286
    %v320 = vld [vmem:[#allocation3 + $0x20] sm:$0xff]
    %v321 = vld [vmem:[#allocation3 + $0x28] sm:$0xff]
    %v322 = vld [vmem:[#allocation3 + $0x30] sm:$0xff]
    %v323 = vld [vmem:[#allocation3 + $0x38] sm:$0xff]
    %v324 = vld [vmem:[#allocation3 + $0x40] sm:$0xff]
    %v325 = vld [vmem:[#allocation3 + $0x48] sm:$0xff]
    %v326 = vld [vmem:[#allocation3 + $0x50] sm:$0xff]
    %v327 = vld [vmem:[#allocation3 + $0x58] sm:$0xff]
    %v328 = vld [vmem:[#allocation3 + $0x60] sm:$0xf]
    %v329 = vld [vmem:[#allocation3 + $0x68] sm:$0xf]
    %v330 = vld [vmem:[#allocation3 + $0x70] sm:$0xf]
    %v331 = vld [vmem:[#allocation3 + $0x78] sm:$0xf]
    %v332 = vld [vmem:[#allocation2] sm:$0xff]
    %v333 = vld [vmem:[#allocation2 + $0x8] sm:$0xff]
    %v334 = vld [vmem:[#allocation2 + $0x10] sm:$0xff]
    %v335 = vld [vmem:[#allocation2 + $0x18] sm:$0xff]
    %vm336 = vcmask 162816
    %v338 = vsel %vm336, 0.0, 0
    %vm340 = vcmask 1043456
    %v342 = vsel %vm340, %v328, 0
    %v345 = vsel %vm340, %v329, 0
    %v348 = vsel %vm340, %v330, 0
    %v351 = vsel %vm340, %v331, 0
    %353 = vmatprep.subr.mxu0 0.0
    %354 = vmatpush1.msra.mxu0 0.0
    %355 = vmatprep.subr.mxu0 0.0
    %356 = vmatpush1.msra.mxu0 0.0
    %357 = vmatprep.subr.mxu0 0.0
    %358 = vmatpush1.msra.mxu0 0.0
    %359 = vmatprep.subr.mxu0 0.0
    %360 = vmatpush1.msra.mxu0 0.0
    %361 = vmatprep.subr.mxu0 0.0
    %362 = vmatpush1.msra.mxu0 0.0
    %363 = vmatprep.subr.mxu0 0.0
    %364 = vmatpush1.msra.mxu0 0.0
    %365 = vmatprep.subr.mxu0 0.0
    %366 = vmatpush1.msra.mxu0 0.0
    %367 = vmatprep.subr.mxu0 0.0
    %368 = vmatpush1.msra.mxu0 0.0
    %369 = vmatprep.subr.mxu0 0.0
    %370 = vmatpush1.msra.mxu0 0.0
    %371 = vmatprep.subr.mxu0 0.0
    %372 = vmatpush1.msra.mxu0 0.0
    %373 = vmatprep.subr.mxu0 0.0
    %374 = vmatpush1.msra.mxu0 0.0
    %375 = vmatprep.subr.mxu0 0.0
    %376 = vmatpush1.msra.mxu0 0.0
    %377 = vmatprep.subr.mxu0 0.0
    %378 = vmatpush1.msra.mxu0 0.0
    %379 = vmatprep.subr.mxu0 %v345
    %380 = vmatpush1.msra.mxu0 %v342
    %381 = vmatprep.subr.mxu0 %v325
    %382 = vmatpush1.msra.mxu0 %v324
    %383 = vmatprep.subr.mxu0 %v321
    %384 = vmatpush1.msra.mxu0 %v320
    %385 = vmatprep.subr.mxu0 0.0
    %386 = vmatpush2.msra.mxu0 0.0
    %387 = vmatprep.subr.mxu0 0.0
    %388 = vmatpush2.msra.mxu0 0.0
    %389 = vmatprep.subr.mxu0 0.0
    %390 = vmatpush2.msra.mxu0 0.0
    %391 = vmatprep.subr.mxu0 0.0
    %392 = vmatpush2.msra.mxu0 0.0
    %393 = vmatprep.subr.mxu0 0.0
    %394 = vmatpush2.msra.mxu0 0.0
    %395 = vmatprep.subr.mxu0 0.0
    %396 = vmatpush2.msra.mxu0 0.0
    %397 = vmatprep.subr.mxu0 0.0
    %398 = vmatpush2.msra.mxu0 0.0
    %399 = vmatprep.subr.mxu0 0.0
    %400 = vmatpush2.msra.mxu0 0.0
    %401 = vmatprep.subr.mxu0 0.0
    %402 = vmatpush2.msra.mxu0 0.0
    %403 = vmatprep.subr.mxu0 0.0
    %404 = vmatpush2.msra.mxu0 0.0
    %405 = vmatprep.subr.mxu0 0.0
    %406 = vmatpush2.msra.mxu0 0.0
    %407 = vmatprep.subr.mxu0 0.0
    %408 = vmatpush2.msra.mxu0 0.0
    %409 = vmatprep.subr.mxu0 0.0
    %410 = vmatpush2.msra.mxu0 0.0
    %411 = vmatprep.subr.mxu0 0.0
    %412 = vmatpush2.msra.mxu0 0.0
    %413 = vmatprep.subr.mxu0 0.0
    %414 = vmatpush2.msra.mxu0 0.0
    %415 = vmatprep.subr.mxu0 0.0
    %416 = vmatpush2.msra.mxu0 0.0
    %417 = vmatprep.mubr.f32.mxu0 0.0
    %418 = vmatmul.mubr.f32.gmra.mxu0 %v338
    %v419 = vpop.f32.mrf.mxu0
    %v420 = vadd.f32 0.0, %v419
    %v421 = vpop.f32.mrf.mxu0
    %v422 = vadd.f32 0.0, %v421
    %423 = vdwg.mxu0
    %424 = vmatprep.subr.mxu0 0.0
    %425 = vmatpush1.msra.mxu0 0.0
    %426 = vmatprep.subr.mxu0 0.0
    %427 = vmatpush1.msra.mxu0 0.0
    %428 = vmatprep.subr.mxu0 0.0
    %429 = vmatpush1.msra.mxu0 0.0
    %430 = vmatprep.subr.mxu0 0.0
    %431 = vmatpush1.msra.mxu0 0.0
    %432 = vmatprep.subr.mxu0 0.0
    %433 = vmatpush1.msra.mxu0 0.0
    %434 = vmatprep.subr.mxu0 0.0
    %435 = vmatpush1.msra.mxu0 0.0
    %436 = vmatprep.subr.mxu0 0.0
    %437 = vmatpush1.msra.mxu0 0.0
    %438 = vmatprep.subr.mxu0 0.0
    %439 = vmatpush1.msra.mxu0 0.0
    %440 = vmatprep.subr.mxu0 0.0
    %441 = vmatpush1.msra.mxu0 0.0
    %442 = vmatprep.subr.mxu0 0.0
    %443 = vmatpush1.msra.mxu0 0.0
    %444 = vmatprep.subr.mxu0 0.0
    %445 = vmatpush1.msra.mxu0 0.0
    %446 = vmatprep.subr.mxu0 0.0
    %447 = vmatpush1.msra.mxu0 0.0
    %448 = vmatprep.subr.mxu0 0.0
    %449 = vmatpush1.msra.mxu0 0.0
    %450 = vmatprep.subr.mxu0 %v351
    %451 = vmatpush1.msra.mxu0 %v348
    %452 = vmatprep.subr.mxu0 %v327
    %453 = vmatpush1.msra.mxu0 %v326
    %454 = vmatprep.subr.mxu0 %v323
    %455 = vmatpush1.msra.mxu0 %v322
    %456 = vmatprep.subr.mxu0 0.0
    %457 = vmatpush2.msra.mxu0 0.0
    %458 = vmatprep.subr.mxu0 0.0
    %459 = vmatpush2.msra.mxu0 0.0
    %460 = vmatprep.subr.mxu0 0.0
    %461 = vmatpush2.msra.mxu0 0.0
    %462 = vmatprep.subr.mxu0 0.0
    %463 = vmatpush2.msra.mxu0 0.0
    %464 = vmatprep.subr.mxu0 0.0
    %465 = vmatpush2.msra.mxu0 0.0
    %466 = vmatprep.subr.mxu0 0.0
    %467 = vmatpush2.msra.mxu0 0.0
    %468 = vmatprep.subr.mxu0 0.0
    %469 = vmatpush2.msra.mxu0 0.0
    %470 = vmatprep.subr.mxu0 0.0
    %471 = vmatpush2.msra.mxu0 0.0
    %472 = vmatprep.subr.mxu0 0.0
    %473 = vmatpush2.msra.mxu0 0.0
    %474 = vmatprep.subr.mxu0 0.0
    %475 = vmatpush2.msra.mxu0 0.0
    %476 = vmatprep.subr.mxu0 0.0
    %477 = vmatpush2.msra.mxu0 0.0
    %478 = vmatprep.subr.mxu0 0.0
    %479 = vmatpush2.msra.mxu0 0.0
    %480 = vmatprep.subr.mxu0 0.0
    %481 = vmatpush2.msra.mxu0 0.0
    %482 = vmatprep.subr.mxu0 0.0
    %483 = vmatpush2.msra.mxu0 0.0
    %484 = vmatprep.subr.mxu0 0.0
    %485 = vmatpush2.msra.mxu0 0.0
    %486 = vmatprep.subr.mxu0 0.0
    %487 = vmatpush2.msra.mxu0 0.0
    %488 = vmatprep.mubr.f32.mxu0 0.0
    %489 = vmatmul.mubr.f32.gmra.mxu0 %v338
    %v490 = vpop.f32.mrf.mxu0
    %v491 = vadd.f32 0.0, %v490
    %v492 = vpop.f32.mrf.mxu0
    %v493 = vadd.f32 0.0, %v492
    %494 = vdwg.mxu0
    %v495 = vadd.f32 %v332, %v420
    %v496 = vadd.f32 %v333, %v422
    %v497 = vadd.f32 %v334, %v491
    %v498 = vadd.f32 %v335, %v493
    %v499 = vxor.u32 %v495, 2147483648
    %v500 = vmul.f32 %v499, 1.442695
    %v501 = vpow.pop %v500
    %v502 = vadd.f32 %v501, 1.0
    %v503 = vrcp.pop %v502
    %v504 = vmul.f32 1.0, %v503
    %v505 = vxor.u32 %v496, 2147483648
    %v506 = vmul.f32 %v505, 1.442695
    %v507 = vpow.pop %v506
    %v508 = vadd.f32 %v507, 1.0
    %v509 = vrcp.pop %v508
    %v510 = vmul.f32 1.0, %v509
    %v511 = vtanh.pop %v497
    %v512 = vxor.u32 %v498, 2147483648
    %v513 = vmul.f32 %v512, 1.442695
    %v514 = vpow.pop %v513
    %v515 = vadd.f32 %v514, 1.0
    %v516 = vrcp.pop %v515
    %v517 = vmul.f32 1.0, %v516
    %v518 = vmul.f32 %v510, 0.0
    %v519 = vmul.f32 %v504, %v511
    %v520 = vadd.f32 %v518, %v519
    %v521 = vtanh.pop %v520
    %v522 = vmul.f32 %v517, %v521
    %v523 = vld [vmem:[#allocation2 + $0x20] sm:$0xff]
    %v524 = vld [vmem:[#allocation2 + $0x28] sm:$0xff]
    %v525 = vld [vmem:[#allocation2 + $0x30] sm:$0xff]
    %v526 = vld [vmem:[#allocation2 + $0x38] sm:$0xff]
    %v528 = vsel %vm336, %v522, 0
    %530 = vmatprep.subr.mxu0 0.0
    %531 = vmatpush1.msra.mxu0 0.0
    %532 = vmatprep.subr.mxu0 0.0
    %533 = vmatpush1.msra.mxu0 0.0
    %534 = vmatprep.subr.mxu0 0.0
    %535 = vmatpush1.msra.mxu0 0.0
    %536 = vmatprep.subr.mxu0 0.0
    %537 = vmatpush1.msra.mxu0 0.0
    %538 = vmatprep.subr.mxu0 0.0
    %539 = vmatpush1.msra.mxu0 0.0
    %540 = vmatprep.subr.mxu0 0.0
    %541 = vmatpush1.msra.mxu0 0.0
    %542 = vmatprep.subr.mxu0 0.0
    %543 = vmatpush1.msra.mxu0 0.0
    %544 = vmatprep.subr.mxu0 0.0
    %545 = vmatpush1.msra.mxu0 0.0
    %546 = vmatprep.subr.mxu0 0.0
    %547 = vmatpush1.msra.mxu0 0.0
    %548 = vmatprep.subr.mxu0 0.0
    %549 = vmatpush1.msra.mxu0 0.0
    %550 = vmatprep.subr.mxu0 0.0
    %551 = vmatpush1.msra.mxu0 0.0
    %552 = vmatprep.subr.mxu0 0.0
    %553 = vmatpush1.msra.mxu0 0.0
    %554 = vmatprep.subr.mxu0 0.0
    %555 = vmatpush1.msra.mxu0 0.0
    %556 = vmatprep.subr.mxu0 %v345
    %557 = vmatpush1.msra.mxu0 %v342
    %558 = vmatprep.subr.mxu0 %v325
    %559 = vmatpush1.msra.mxu0 %v324
    %560 = vmatprep.subr.mxu0 %v321
    %561 = vmatpush1.msra.mxu0 %v320
    %562 = vmatprep.subr.mxu0 0.0
    %563 = vmatpush2.msra.mxu0 0.0
    %564 = vmatprep.subr.mxu0 0.0
    %565 = vmatpush2.msra.mxu0 0.0
    %566 = vmatprep.subr.mxu0 0.0
    %567 = vmatpush2.msra.mxu0 0.0
    %568 = vmatprep.subr.mxu0 0.0
    %569 = vmatpush2.msra.mxu0 0.0
    %570 = vmatprep.subr.mxu0 0.0
    %571 = vmatpush2.msra.mxu0 0.0
    %572 = vmatprep.subr.mxu0 0.0
    %573 = vmatpush2.msra.mxu0 0.0
    %574 = vmatprep.subr.mxu0 0.0
    %575 = vmatpush2.msra.mxu0 0.0
    %576 = vmatprep.subr.mxu0 0.0
    %577 = vmatpush2.msra.mxu0 0.0
    %578 = vmatprep.subr.mxu0 0.0
    %579 = vmatpush2.msra.mxu0 0.0
    %580 = vmatprep.subr.mxu0 0.0
    %581 = vmatpush2.msra.mxu0 0.0
    %582 = vmatprep.subr.mxu0 0.0
    %583 = vmatpush2.msra.mxu0 0.0
    %584 = vmatprep.subr.mxu0 0.0
    %585 = vmatpush2.msra.mxu0 0.0
    %586 = vmatprep.subr.mxu0 0.0
    %587 = vmatpush2.msra.mxu0 0.0
    %588 = vmatprep.subr.mxu0 0.0
    %589 = vmatpush2.msra.mxu0 0.0
    %590 = vmatprep.subr.mxu0 0.0
    %591 = vmatpush2.msra.mxu0 0.0
    %592 = vmatprep.subr.mxu0 0.0
    %593 = vmatpush2.msra.mxu0 0.0
    %594 = vmatprep.mubr.f32.mxu0 0.0
    %595 = vmatmul.mubr.f32.gmra.mxu0 %v528
    %v596 = vpop.f32.mrf.mxu0
    %v597 = vadd.f32 0.0, %v596
    %v598 = vpop.f32.mrf.mxu0
    %v599 = vadd.f32 0.0, %v598
    %600 = vdwg.mxu0
    %601 = vmatprep.subr.mxu0 0.0
    %602 = vmatpush1.msra.mxu0 0.0
    %603 = vmatprep.subr.mxu0 0.0
    %604 = vmatpush1.msra.mxu0 0.0
    %605 = vmatprep.subr.mxu0 0.0
    %606 = vmatpush1.msra.mxu0 0.0
    %607 = vmatprep.subr.mxu0 0.0
    %608 = vmatpush1.msra.mxu0 0.0
    %609 = vmatprep.subr.mxu0 0.0
    %610 = vmatpush1.msra.mxu0 0.0
    %611 = vmatprep.subr.mxu0 0.0
    %612 = vmatpush1.msra.mxu0 0.0
    %613 = vmatprep.subr.mxu0 0.0
    %614 = vmatpush1.msra.mxu0 0.0
    %615 = vmatprep.subr.mxu0 0.0
    %616 = vmatpush1.msra.mxu0 0.0
    %617 = vmatprep.subr.mxu0 0.0
    %618 = vmatpush1.msra.mxu0 0.0
    %619 = vmatprep.subr.mxu0 0.0
    %620 = vmatpush1.msra.mxu0 0.0
    %621 = vmatprep.subr.mxu0 0.0
    %622 = vmatpush1.msra.mxu0 0.0
    %623 = vmatprep.subr.mxu0 0.0
    %624 = vmatpush1.msra.mxu0 0.0
    %625 = vmatprep.subr.mxu0 0.0
    %626 = vmatpush1.msra.mxu0 0.0
    %627 = vmatprep.subr.mxu0 %v351
    %628 = vmatpush1.msra.mxu0 %v348
    %629 = vmatprep.subr.mxu0 %v327
    %630 = vmatpush1.msra.mxu0 %v326
    %631 = vmatprep.subr.mxu0 %v323
    %632 = vmatpush1.msra.mxu0 %v322
    %633 = vmatprep.subr.mxu0 0.0
    %634 = vmatpush2.msra.mxu0 0.0
    %635 = vmatprep.subr.mxu0 0.0
    %636 = vmatpush2.msra.mxu0 0.0
    %637 = vmatprep.subr.mxu0 0.0
    %638 = vmatpush2.msra.mxu0 0.0
    %639 = vmatprep.subr.mxu0 0.0
    %640 = vmatpush2.msra.mxu0 0.0
    %641 = vmatprep.subr.mxu0 0.0
    %642 = vmatpush2.msra.mxu0 0.0
    %643 = vmatprep.subr.mxu0 0.0
    %644 = vmatpush2.msra.mxu0 0.0
    %645 = vmatprep.subr.mxu0 0.0
    %646 = vmatpush2.msra.mxu0 0.0
    %647 = vmatprep.subr.mxu0 0.0
    %648 = vmatpush2.msra.mxu0 0.0
    %649 = vmatprep.subr.mxu0 0.0
    %650 = vmatpush2.msra.mxu0 0.0
    %651 = vmatprep.subr.mxu0 0.0
    %652 = vmatpush2.msra.mxu0 0.0
    %653 = vmatprep.subr.mxu0 0.0
    %654 = vmatpush2.msra.mxu0 0.0
    %655 = vmatprep.subr.mxu0 0.0
    %656 = vmatpush2.msra.mxu0 0.0
    %657 = vmatprep.subr.mxu0 0.0
    %658 = vmatpush2.msra.mxu0 0.0
    %659 = vmatprep.subr.mxu0 0.0
    %660 = vmatpush2.msra.mxu0 0.0
    %661 = vmatprep.subr.mxu0 0.0
    %662 = vmatpush2.msra.mxu0 0.0
    %663 = vmatprep.subr.mxu0 0.0
    %664 = vmatpush2.msra.mxu0 0.0
    %665 = vmatprep.mubr.f32.mxu0 0.0
    %666 = vmatmul.mubr.f32.gmra.mxu0 %v528
    %v667 = vpop.f32.mrf.mxu0
    %v668 = vadd.f32 0.0, %v667
    %v669 = vpop.f32.mrf.mxu0
    %v670 = vadd.f32 0.0, %v669
    %671 = vdwg.mxu0
    %v672 = vadd.f32 %v523, %v597
    %v673 = vadd.f32 %v524, %v599
    %v674 = vadd.f32 %v525, %v668
    %v675 = vadd.f32 %v526, %v670
    %v676 = vxor.u32 %v672, 2147483648
    %v677 = vmul.f32 %v676, 1.442695
    %v678 = vpow.pop %v677
    %v679 = vadd.f32 %v678, 1.0
    %v680 = vrcp.pop %v679
    %v681 = vmul.f32 1.0, %v680
    %v682 = vxor.u32 %v673, 2147483648
    %v683 = vmul.f32 %v682, 1.442695
    %v684 = vpow.pop %v683
    %v685 = vadd.f32 %v684, 1.0
    %v686 = vrcp.pop %v685
    %v687 = vmul.f32 1.0, %v686
    %v688 = vtanh.pop %v674
    %v689 = vxor.u32 %v675, 2147483648
    %v690 = vmul.f32 %v689, 1.442695
    %v691 = vpow.pop %v690
    %v692 = vadd.f32 %v691, 1.0
    %v693 = vrcp.pop %v692
    %v694 = vmul.f32 1.0, %v693
    %v695 = vmul.f32 %v687, %v520
    %v696 = vmul.f32 %v681, %v688
    %v697 = vadd.f32 %v695, %v696
    %v698 = vtanh.pop %v697
    %v699 = vmul.f32 %v694, %v698
    %v700 = vld [vmem:[#allocation2 + $0x40] sm:$0xff]
    %v701 = vld [vmem:[#allocation2 + $0x48] sm:$0xff]
    %v702 = vld [vmem:[#allocation2 + $0x50] sm:$0xff]
    %v703 = vld [vmem:[#allocation2 + $0x58] sm:$0xff]
    %v705 = vsel %vm336, %v699, 0
    %707 = vmatprep.subr.mxu0 0.0
    %708 = vmatpush1.msra.mxu0 0.0
    %709 = vmatprep.subr.mxu0 0.0
    %710 = vmatpush1.msra.mxu0 0.0
    %711 = vmatprep.subr.mxu0 0.0
    %712 = vmatpush1.msra.mxu0 0.0
    %713 = vmatprep.subr.mxu0 0.0
    %714 = vmatpush1.msra.mxu0 0.0
    %715 = vmatprep.subr.mxu0 0.0
    %716 = vmatpush1.msra.mxu0 0.0
    %717 = vmatprep.subr.mxu0 0.0
    %718 = vmatpush1.msra.mxu0 0.0
    %719 = vmatprep.subr.mxu0 0.0
    %720 = vmatpush1.msra.mxu0 0.0
    %721 = vmatprep.subr.mxu0 0.0
    %722 = vmatpush1.msra.mxu0 0.0
    %723 = vmatprep.subr.mxu0 0.0
    %724 = vmatpush1.msra.mxu0 0.0
    %725 = vmatprep.subr.mxu0 0.0
    %726 = vmatpush1.msra.mxu0 0.0
    %727 = vmatprep.subr.mxu0 0.0
    %728 = vmatpush1.msra.mxu0 0.0
    %729 = vmatprep.subr.mxu0 0.0
    %730 = vmatpush1.msra.mxu0 0.0
    %731 = vmatprep.subr.mxu0 0.0
    %732 = vmatpush1.msra.mxu0 0.0
    %733 = vmatprep.subr.mxu0 %v345
    %734 = vmatpush1.msra.mxu0 %v342
    %735 = vmatprep.subr.mxu0 %v325
    %736 = vmatpush1.msra.mxu0 %v324
    %737 = vmatprep.subr.mxu0 %v321
    %738 = vmatpush1.msra.mxu0 %v320
    %739 = vmatprep.subr.mxu0 0.0
    %740 = vmatpush2.msra.mxu0 0.0
    %741 = vmatprep.subr.mxu0 0.0
    %742 = vmatpush2.msra.mxu0 0.0
    %743 = vmatprep.subr.mxu0 0.0
    %744 = vmatpush2.msra.mxu0 0.0
    %745 = vmatprep.subr.mxu0 0.0
    %746 = vmatpush2.msra.mxu0 0.0
    %747 = vmatprep.subr.mxu0 0.0
    %748 = vmatpush2.msra.mxu0 0.0
    %749 = vmatprep.subr.mxu0 0.0
    %750 = vmatpush2.msra.mxu0 0.0
    %751 = vmatprep.subr.mxu0 0.0
    %752 = vmatpush2.msra.mxu0 0.0
    %753 = vmatprep.subr.mxu0 0.0
    %754 = vmatpush2.msra.mxu0 0.0
    %755 = vmatprep.subr.mxu0 0.0
    %756 = vmatpush2.msra.mxu0 0.0
    %757 = vmatprep.subr.mxu0 0.0
    %758 = vmatpush2.msra.mxu0 0.0
    %759 = vmatprep.subr.mxu0 0.0
    %760 = vmatpush2.msra.mxu0 0.0
    %761 = vmatprep.subr.mxu0 0.0
    %762 = vmatpush2.msra.mxu0 0.0
    %763 = vmatprep.subr.mxu0 0.0
    %764 = vmatpush2.msra.mxu0 0.0
    %765 = vmatprep.subr.mxu0 0.0
    %766 = vmatpush2.msra.mxu0 0.0
    %767 = vmatprep.subr.mxu0 0.0
    %768 = vmatpush2.msra.mxu0 0.0
    %769 = vmatprep.subr.mxu0 0.0
    %770 = vmatpush2.msra.mxu0 0.0
    %771 = vmatprep.mubr.f32.mxu0 0.0
    %772 = vmatmul.mubr.f32.gmra.mxu0 %v705
    %v773 = vpop.f32.mrf.mxu0
    %v774 = vadd.f32 0.0, %v773
    %v775 = vpop.f32.mrf.mxu0
    %v776 = vadd.f32 0.0, %v775
    %777 = vdwg.mxu0
    %778 = vmatprep.subr.mxu0 0.0
    %779 = vmatpush1.msra.mxu0 0.0
    %780 = vmatprep.subr.mxu0 0.0
    %781 = vmatpush1.msra.mxu0 0.0
    %782 = vmatprep.subr.mxu0 0.0
    %783 = vmatpush1.msra.mxu0 0.0
    %784 = vmatprep.subr.mxu0 0.0
    %785 = vmatpush1.msra.mxu0 0.0
    %786 = vmatprep.subr.mxu0 0.0
    %787 = vmatpush1.msra.mxu0 0.0
    %788 = vmatprep.subr.mxu0 0.0
    %789 = vmatpush1.msra.mxu0 0.0
    %790 = vmatprep.subr.mxu0 0.0
    %791 = vmatpush1.msra.mxu0 0.0
    %792 = vmatprep.subr.mxu0 0.0
    %793 = vmatpush1.msra.mxu0 0.0
    %794 = vmatprep.subr.mxu0 0.0
    %795 = vmatpush1.msra.mxu0 0.0
    %796 = vmatprep.subr.mxu0 0.0
    %797 = vmatpush1.msra.mxu0 0.0
    %798 = vmatprep.subr.mxu0 0.0
    %799 = vmatpush1.msra.mxu0 0.0
    %800 = vmatprep.subr.mxu0 0.0
    %801 = vmatpush1.msra.mxu0 0.0
    %802 = vmatprep.subr.mxu0 0.0
    %803 = vmatpush1.msra.mxu0 0.0
    %804 = vmatprep.subr.mxu0 %v351
    %805 = vmatpush1.msra.mxu0 %v348
    %806 = vmatprep.subr.mxu0 %v327
    %807 = vmatpush1.msra.mxu0 %v326
    %808 = vmatprep.subr.mxu0 %v323
    %809 = vmatpush1.msra.mxu0 %v322
    %810 = vmatprep.subr.mxu0 0.0
    %811 = vmatpush2.msra.mxu0 0.0
    %812 = vmatprep.subr.mxu0 0.0
    %813 = vmatpush2.msra.mxu0 0.0
    %814 = vmatprep.subr.mxu0 0.0
    %815 = vmatpush2.msra.mxu0 0.0
    %816 = vmatprep.subr.mxu0 0.0
    %817 = vmatpush2.msra.mxu0 0.0
    %818 = vmatprep.subr.mxu0 0.0
    %819 = vmatpush2.msra.mxu0 0.0
    %820 = vmatprep.subr.mxu0 0.0
    %821 = vmatpush2.msra.mxu0 0.0
    %822 = vmatprep.subr.mxu0 0.0
    %823 = vmatpush2.msra.mxu0 0.0
    %824 = vmatprep.subr.mxu0 0.0
    %825 = vmatpush2.msra.mxu0 0.0
    %826 = vmatprep.subr.mxu0 0.0
    %827 = vmatpush2.msra.mxu0 0.0
    %828 = vmatprep.subr.mxu0 0.0
    %829 = vmatpush2.msra.mxu0 0.0
    %830 = vmatprep.subr.mxu0 0.0
    %831 = vmatpush2.msra.mxu0 0.0
    %832 = vmatprep.subr.mxu0 0.0
    %833 = vmatpush2.msra.mxu0 0.0
    %834 = vmatprep.subr.mxu0 0.0
    %835 = vmatpush2.msra.mxu0 0.0
    %836 = vmatprep.subr.mxu0 0.0
    %837 = vmatpush2.msra.mxu0 0.0
    %838 = vmatprep.subr.mxu0 0.0
    %839 = vmatpush2.msra.mxu0 0.0
    %840 = vmatprep.subr.mxu0 0.0
    %841 = vmatpush2.msra.mxu0 0.0
    %842 = vmatprep.mubr.f32.mxu0 0.0
    %843 = vmatmul.mubr.f32.gmra.mxu0 %v705
    %v844 = vpop.f32.mrf.mxu0
    %v845 = vadd.f32 0.0, %v844
    %v846 = vpop.f32.mrf.mxu0
    %v847 = vadd.f32 0.0, %v846
    %848 = vdwg.mxu0
    %v849 = vadd.f32 %v700, %v774
    %v850 = vadd.f32 %v701, %v776
    %v851 = vadd.f32 %v702, %v845
    %v852 = vadd.f32 %v703, %v847
    %v853 = vxor.u32 %v849, 2147483648
    %v854 = vmul.f32 %v853, 1.442695
    %v855 = vpow.pop %v854
    %v856 = vadd.f32 %v855, 1.0
    %v857 = vrcp.pop %v856
    %v858 = vmul.f32 1.0, %v857
    %v859 = vxor.u32 %v850, 2147483648
    %v860 = vmul.f32 %v859, 1.442695
    %v861 = vpow.pop %v860
    %v862 = vadd.f32 %v861, 1.0
    %v863 = vrcp.pop %v862
    %v864 = vmul.f32 1.0, %v863
    %v865 = vtanh.pop %v851
    %v866 = vxor.u32 %v852, 2147483648
    %v867 = vmul.f32 %v866, 1.442695
    %v868 = vpow.pop %v867
    %v869 = vadd.f32 %v868, 1.0
    %v870 = vrcp.pop %v869
    %v871 = vmul.f32 1.0, %v870
    %v872 = vmul.f32 %v864, %v697
    %v873 = vmul.f32 %v858, %v865
    %v874 = vadd.f32 %v872, %v873
    %v875 = vtanh.pop %v874
    %v876 = vmul.f32 %v871, %v875
    %v877 = vld [vmem:[#allocation2 + $0x60] sm:$0xff]
    %v878 = vld [vmem:[#allocation2 + $0x68] sm:$0xff]
    %v879 = vld [vmem:[#allocation2 + $0x70] sm:$0xff]
    %v880 = vld [vmem:[#allocation2 + $0x78] sm:$0xff]
    %v882 = vsel %vm336, %v876, 0
    %884 = vmatprep.subr.mxu0 0.0
    %885 = vmatpush1.msra.mxu0 0.0
    %886 = vmatprep.subr.mxu0 0.0
    %887 = vmatpush1.msra.mxu0 0.0
    %888 = vmatprep.subr.mxu0 0.0
    %889 = vmatpush1.msra.mxu0 0.0
    %890 = vmatprep.subr.mxu0 0.0
    %891 = vmatpush1.msra.mxu0 0.0
    %892 = vmatprep.subr.mxu0 0.0
    %893 = vmatpush1.msra.mxu0 0.0
    %894 = vmatprep.subr.mxu0 0.0
    %895 = vmatpush1.msra.mxu0 0.0
    %896 = vmatprep.subr.mxu0 0.0
    %897 = vmatpush1.msra.mxu0 0.0
    %898 = vmatprep.subr.mxu0 0.0
    %899 = vmatpush1.msra.mxu0 0.0
    %900 = vmatprep.subr.mxu0 0.0
    %901 = vmatpush1.msra.mxu0 0.0
    %902 = vmatprep.subr.mxu0 0.0
    %903 = vmatpush1.msra.mxu0 0.0
    %904 = vmatprep.subr.mxu0 0.0
    %905 = vmatpush1.msra.mxu0 0.0
    %906 = vmatprep.subr.mxu0 0.0
    %907 = vmatpush1.msra.mxu0 0.0
    %908 = vmatprep.subr.mxu0 0.0
    %909 = vmatpush1.msra.mxu0 0.0
    %910 = vmatprep.subr.mxu0 %v345
    %911 = vmatpush1.msra.mxu0 %v342
    %912 = vmatprep.subr.mxu0 %v325
    %913 = vmatpush1.msra.mxu0 %v324
    %914 = vmatprep.subr.mxu0 %v321
    %915 = vmatpush1.msra.mxu0 %v320
    %916 = vmatprep.subr.mxu0 0.0
    %917 = vmatpush2.msra.mxu0 0.0
    %918 = vmatprep.subr.mxu0 0.0
    %919 = vmatpush2.msra.mxu0 0.0
    %920 = vmatprep.subr.mxu0 0.0
    %921 = vmatpush2.msra.mxu0 0.0
    %922 = vmatprep.subr.mxu0 0.0
    %923 = vmatpush2.msra.mxu0 0.0
    %924 = vmatprep.subr.mxu0 0.0
    %925 = vmatpush2.msra.mxu0 0.0
    %926 = vmatprep.subr.mxu0 0.0
    %927 = vmatpush2.msra.mxu0 0.0
    %928 = vmatprep.subr.mxu0 0.0
    %929 = vmatpush2.msra.mxu0 0.0
    %930 = vmatprep.subr.mxu0 0.0
    %931 = vmatpush2.msra.mxu0 0.0
    %932 = vmatprep.subr.mxu0 0.0
    %933 = vmatpush2.msra.mxu0 0.0
    %934 = vmatprep.subr.mxu0 0.0
    %935 = vmatpush2.msra.mxu0 0.0
    %936 = vmatprep.subr.mxu0 0.0
    %937 = vmatpush2.msra.mxu0 0.0
    %938 = vmatprep.subr.mxu0 0.0
    %939 = vmatpush2.msra.mxu0 0.0
    %940 = vmatprep.subr.mxu0 0.0
    %941 = vmatpush2.msra.mxu0 0.0
    %942 = vmatprep.subr.mxu0 0.0
    %943 = vmatpush2.msra.mxu0 0.0
    %944 = vmatprep.subr.mxu0 0.0
    %945 = vmatpush2.msra.mxu0 0.0
    %946 = vmatprep.subr.mxu0 0.0
    %947 = vmatpush2.msra.mxu0 0.0
    %948 = vmatprep.mubr.f32.mxu0 0.0
    %949 = vmatmul.mubr.f32.gmra.mxu0 %v882
    %v950 = vpop.f32.mrf.mxu0
    %v951 = vadd.f32 0.0, %v950
    %v952 = vpop.f32.mrf.mxu0
    %v953 = vadd.f32 0.0, %v952
    %954 = vdwg.mxu0
    %955 = vmatprep.subr.mxu0 0.0
    %956 = vmatpush1.msra.mxu0 0.0
    %957 = vmatprep.subr.mxu0 0.0
    %958 = vmatpush1.msra.mxu0 0.0
    %959 = vmatprep.subr.mxu0 0.0
    %960 = vmatpush1.msra.mxu0 0.0
    %961 = vmatprep.subr.mxu0 0.0
    %962 = vmatpush1.msra.mxu0 0.0
    %963 = vmatprep.subr.mxu0 0.0
    %964 = vmatpush1.msra.mxu0 0.0
    %965 = vmatprep.subr.mxu0 0.0
    %966 = vmatpush1.msra.mxu0 0.0
    %967 = vmatprep.subr.mxu0 0.0
    %968 = vmatpush1.msra.mxu0 0.0
    %969 = vmatprep.subr.mxu0 0.0
    %970 = vmatpush1.msra.mxu0 0.0
    %971 = vmatprep.subr.mxu0 0.0
    %972 = vmatpush1.msra.mxu0 0.0
    %973 = vmatprep.subr.mxu0 0.0
    %974 = vmatpush1.msra.mxu0 0.0
    %975 = vmatprep.subr.mxu0 0.0
    %976 = vmatpush1.msra.mxu0 0.0
    %977 = vmatprep.subr.mxu0 0.0
    %978 = vmatpush1.msra.mxu0 0.0
    %979 = vmatprep.subr.mxu0 0.0
    %980 = vmatpush1.msra.mxu0 0.0
    %981 = vmatprep.subr.mxu0 %v351
    %982 = vmatpush1.msra.mxu0 %v348
    %983 = vmatprep.subr.mxu0 %v327
    %984 = vmatpush1.msra.mxu0 %v326
    %985 = vmatprep.subr.mxu0 %v323
    %986 = vmatpush1.msra.mxu0 %v322
    %987 = vmatprep.subr.mxu0 0.0
    %988 = vmatpush2.msra.mxu0 0.0
    %989 = vmatprep.subr.mxu0 0.0
    %990 = vmatpush2.msra.mxu0 0.0
    %991 = vmatprep.subr.mxu0 0.0
    %992 = vmatpush2.msra.mxu0 0.0
    %993 = vmatprep.subr.mxu0 0.0
    %994 = vmatpush2.msra.mxu0 0.0
    %995 = vmatprep.subr.mxu0 0.0
    %996 = vmatpush2.msra.mxu0 0.0
    %997 = vmatprep.subr.mxu0 0.0
    %998 = vmatpush2.msra.mxu0 0.0
    %999 = vmatprep.subr.mxu0 0.0
    %1000 = vmatpush2.msra.mxu0 0.0
    %1001 = vmatprep.subr.mxu0 0.0
    %1002 = vmatpush2.msra.mxu0 0.0
    %1003 = vmatprep.subr.mxu0 0.0
    %1004 = vmatpush2.msra.mxu0 0.0
    %1005 = vmatprep.subr.mxu0 0.0
    %1006 = vmatpush2.msra.mxu0 0.0
    %1007 = vmatprep.subr.mxu0 0.0
    %1008 = vmatpush2.msra.mxu0 0.0
    %1009 = vmatprep.subr.mxu0 0.0
    %1010 = vmatpush2.msra.mxu0 0.0
    %1011 = vmatprep.subr.mxu0 0.0
    %1012 = vmatpush2.msra.mxu0 0.0
    %1013 = vmatprep.subr.mxu0 0.0
    %1014 = vmatpush2.msra.mxu0 0.0
    %1015 = vmatprep.subr.mxu0 0.0
    %1016 = vmatpush2.msra.mxu0 0.0
    %1017 = vmatprep.subr.mxu0 0.0
    %1018 = vmatpush2.msra.mxu0 0.0
    %1019 = vmatprep.mubr.f32.mxu0 0.0
    %1020 = vmatmul.mubr.f32.gmra.mxu0 %v882
    %v1021 = vpop.f32.mrf.mxu0
    %v1022 = vadd.f32 0.0, %v1021
    %v1023 = vpop.f32.mrf.mxu0
    %v1024 = vadd.f32 0.0, %v1023
    %1025 = vdwg.mxu0
    %v1026 = vadd.f32 %v877, %v951
    %v1027 = vadd.f32 %v878, %v953
    %v1028 = vadd.f32 %v879, %v1022
    %v1029 = vadd.f32 %v880, %v1024
    %v1030 = vxor.u32 %v1026, 2147483648
    %v1031 = vmul.f32 %v1030, 1.442695
    %v1032 = vpow.pop %v1031
    %v1033 = vadd.f32 %v1032, 1.0
    %v1034 = vrcp.pop %v1033
    %v1035 = vmul.f32 1.0, %v1034
    %v1036 = vxor.u32 %v1027, 2147483648
    %v1037 = vmul.f32 %v1036, 1.442695
    %v1038 = vpow.pop %v1037
    %v1039 = vadd.f32 %v1038, 1.0
    %v1040 = vrcp.pop %v1039
    %v1041 = vmul.f32 1.0, %v1040
    %v1042 = vtanh.pop %v1028
    %v1043 = vxor.u32 %v1029, 2147483648
    %v1044 = vmul.f32 %v1043, 1.442695
    %v1045 = vpow.pop %v1044
    %v1046 = vadd.f32 %v1045, 1.0
    %v1047 = vrcp.pop %v1046
    %v1048 = vmul.f32 1.0, %v1047
    %v1049 = vmul.f32 %v1041, %v874
    %v1050 = vmul.f32 %v1035, %v1042
    %v1051 = vadd.f32 %v1049, %v1050
    %v1052 = vtanh.pop %v1051
    %v1053 = vmul.f32 %v1048, %v1052
    %v1054 = vld [vmem:[#allocation2 + $0x80] sm:$0xff]
    %v1055 = vld [vmem:[#allocation2 + $0x88] sm:$0xff]
    %v1056 = vld [vmem:[#allocation2 + $0x90] sm:$0xff]
    %v1057 = vld [vmem:[#allocation2 + $0x98] sm:$0xff]
    %v1059 = vsel %vm336, %v1053, 0
    %1061 = vmatprep.subr.mxu0 0.0
    %1062 = vmatpush1.msra.mxu0 0.0
    %1063 = vmatprep.subr.mxu0 0.0
    %1064 = vmatpush1.msra.mxu0 0.0
    %1065 = vmatprep.subr.mxu0 0.0
    %1066 = vmatpush1.msra.mxu0 0.0
    %1067 = vmatprep.subr.mxu0 0.0
    %1068 = vmatpush1.msra.mxu0 0.0
    %1069 = vmatprep.subr.mxu0 0.0
    %1070 = vmatpush1.msra.mxu0 0.0
    %1071 = vmatprep.subr.mxu0 0.0
    %1072 = vmatpush1.msra.mxu0 0.0
    %1073 = vmatprep.subr.mxu0 0.0
    %1074 = vmatpush1.msra.mxu0 0.0
    %1075 = vmatprep.subr.mxu0 0.0
    %1076 = vmatpush1.msra.mxu0 0.0
    %1077 = vmatprep.subr.mxu0 0.0
    %1078 = vmatpush1.msra.mxu0 0.0
    %1079 = vmatprep.subr.mxu0 0.0
    %1080 = vmatpush1.msra.mxu0 0.0
    %1081 = vmatprep.subr.mxu0 0.0
    %1082 = vmatpush1.msra.mxu0 0.0
    %1083 = vmatprep.subr.mxu0 0.0
    %1084 = vmatpush1.msra.mxu0 0.0
    %1085 = vmatprep.subr.mxu0 0.0
    %1086 = vmatpush1.msra.mxu0 0.0
    %1087 = vmatprep.subr.mxu0 %v345
    %1088 = vmatpush1.msra.mxu0 %v342
    %1089 = vmatprep.subr.mxu0 %v325
    %1090 = vmatpush1.msra.mxu0 %v324
    %1091 = vmatprep.subr.mxu0 %v321
    %1092 = vmatpush1.msra.mxu0 %v320
    %1093 = vmatprep.subr.mxu0 0.0
    %1094 = vmatpush2.msra.mxu0 0.0
    %1095 = vmatprep.subr.mxu0 0.0
    %1096 = vmatpush2.msra.mxu0 0.0
    %1097 = vmatprep.subr.mxu0 0.0
    %1098 = vmatpush2.msra.mxu0 0.0
    %1099 = vmatprep.subr.mxu0 0.0
    %1100 = vmatpush2.msra.mxu0 0.0
    %1101 = vmatprep.subr.mxu0 0.0
    %1102 = vmatpush2.msra.mxu0 0.0
    %1103 = vmatprep.subr.mxu0 0.0
    %1104 = vmatpush2.msra.mxu0 0.0
    %1105 = vmatprep.subr.mxu0 0.0
    %1106 = vmatpush2.msra.mxu0 0.0
    %1107 = vmatprep.subr.mxu0 0.0
    %1108 = vmatpush2.msra.mxu0 0.0
    %1109 = vmatprep.subr.mxu0 0.0
    %1110 = vmatpush2.msra.mxu0 0.0
    %1111 = vmatprep.subr.mxu0 0.0
    %1112 = vmatpush2.msra.mxu0 0.0
    %1113 = vmatprep.subr.mxu0 0.0
    %1114 = vmatpush2.msra.mxu0 0.0
    %1115 = vmatprep.subr.mxu0 0.0
    %1116 = vmatpush2.msra.mxu0 0.0
    %1117 = vmatprep.subr.mxu0 0.0
    %1118 = vmatpush2.msra.mxu0 0.0
    %1119 = vmatprep.subr.mxu0 0.0
    %1120 = vmatpush2.msra.mxu0 0.0
    %1121 = vmatprep.subr.mxu0 0.0
    %1122 = vmatpush2.msra.mxu0 0.0
    %1123 = vmatprep.subr.mxu0 0.0
    %1124 = vmatpush2.msra.mxu0 0.0
    %1125 = vmatprep.mubr.f32.mxu0 0.0
    %1126 = vmatmul.mubr.f32.gmra.mxu0 %v1059
    %v1127 = vpop.f32.mrf.mxu0
    %v1128 = vadd.f32 0.0, %v1127
    %v1129 = vpop.f32.mrf.mxu0
    %v1130 = vadd.f32 0.0, %v1129
    %1131 = vdwg.mxu0
    %1132 = vmatprep.subr.mxu0 0.0
    %1133 = vmatpush1.msra.mxu0 0.0
    %1134 = vmatprep.subr.mxu0 0.0
    %1135 = vmatpush1.msra.mxu0 0.0
    %1136 = vmatprep.subr.mxu0 0.0
    %1137 = vmatpush1.msra.mxu0 0.0
    %1138 = vmatprep.subr.mxu0 0.0
    %1139 = vmatpush1.msra.mxu0 0.0
    %1140 = vmatprep.subr.mxu0 0.0
    %1141 = vmatpush1.msra.mxu0 0.0
    %1142 = vmatprep.subr.mxu0 0.0
    %1143 = vmatpush1.msra.mxu0 0.0
    %1144 = vmatprep.subr.mxu0 0.0
    %1145 = vmatpush1.msra.mxu0 0.0
    %1146 = vmatprep.subr.mxu0 0.0
    %1147 = vmatpush1.msra.mxu0 0.0
    %1148 = vmatprep.subr.mxu0 0.0
    %1149 = vmatpush1.msra.mxu0 0.0
    %1150 = vmatprep.subr.mxu0 0.0
    %1151 = vmatpush1.msra.mxu0 0.0
    %1152 = vmatprep.subr.mxu0 0.0
    %1153 = vmatpush1.msra.mxu0 0.0
    %1154 = vmatprep.subr.mxu0 0.0
    %1155 = vmatpush1.msra.mxu0 0.0
    %1156 = vmatprep.subr.mxu0 0.0
    %1157 = vmatpush1.msra.mxu0 0.0
    %1158 = vmatprep.subr.mxu0 %v351
    %1159 = vmatpush1.msra.mxu0 %v348
    %1160 = vmatprep.subr.mxu0 %v327
    %1161 = vmatpush1.msra.mxu0 %v326
    %1162 = vmatprep.subr.mxu0 %v323
    %1163 = vmatpush1.msra.mxu0 %v322
    %1164 = vmatprep.subr.mxu0 0.0
    %1165 = vmatpush2.msra.mxu0 0.0
    %1166 = vmatprep.subr.mxu0 0.0
    %1167 = vmatpush2.msra.mxu0 0.0
    %1168 = vmatprep.subr.mxu0 0.0
    %1169 = vmatpush2.msra.mxu0 0.0
    %1170 = vmatprep.subr.mxu0 0.0
    %1171 = vmatpush2.msra.mxu0 0.0
    %1172 = vmatprep.subr.mxu0 0.0
    %1173 = vmatpush2.msra.mxu0 0.0
    %1174 = vmatprep.subr.mxu0 0.0
    %1175 = vmatpush2.msra.mxu0 0.0
    %1176 = vmatprep.subr.mxu0 0.0
    %1177 = vmatpush2.msra.mxu0 0.0
    %1178 = vmatprep.subr.mxu0 0.0
    %1179 = vmatpush2.msra.mxu0 0.0
    %1180 = vmatprep.subr.mxu0 0.0
    %1181 = vmatpush2.msra.mxu0 0.0
    %1182 = vmatprep.subr.mxu0 0.0
    %1183 = vmatpush2.msra.mxu0 0.0
    %1184 = vmatprep.subr.mxu0 0.0
    %1185 = vmatpush2.msra.mxu0 0.0
    %1186 = vmatprep.subr.mxu0 0.0
    %1187 = vmatpush2.msra.mxu0 0.0
    %1188 = vmatprep.subr.mxu0 0.0
    %1189 = vmatpush2.msra.mxu0 0.0
    %1190 = vmatprep.subr.mxu0 0.0
    %1191 = vmatpush2.msra.mxu0 0.0
    %1192 = vmatprep.subr.mxu0 0.0
    %1193 = vmatpush2.msra.mxu0 0.0
    %1194 = vmatprep.subr.mxu0 0.0
    %1195 = vmatpush2.msra.mxu0 0.0
    %1196 = vmatprep.mubr.f32.mxu0 0.0
    %1197 = vmatmul.mubr.f32.gmra.mxu0 %v1059
    %v1198 = vpop.f32.mrf.mxu0
    %v1199 = vadd.f32 0.0, %v1198
    %v1200 = vpop.f32.mrf.mxu0
    %v1201 = vadd.f32 0.0, %v1200
    %1202 = vdwg.mxu0
    %v1203 = vadd.f32 %v1054, %v1128
    %v1204 = vadd.f32 %v1055, %v1130
    %v1205 = vadd.f32 %v1056, %v1199
    %v1206 = vadd.f32 %v1057, %v1201
    %v1207 = vxor.u32 %v1203, 2147483648
    %v1208 = vmul.f32 %v1207, 1.442695
    %v1209 = vpow.pop %v1208
    %v1210 = vadd.f32 %v1209, 1.0
    %v1211 = vrcp.pop %v1210
    %v1212 = vmul.f32 1.0, %v1211
    %v1213 = vxor.u32 %v1204, 2147483648
    %v1214 = vmul.f32 %v1213, 1.442695
    %v1215 = vpow.pop %v1214
    %v1216 = vadd.f32 %v1215, 1.0
    %v1217 = vrcp.pop %v1216
    %v1218 = vmul.f32 1.0, %v1217
    %v1219 = vtanh.pop %v1205
    %v1220 = vxor.u32 %v1206, 2147483648
    %v1221 = vmul.f32 %v1220, 1.442695
    %v1222 = vpow.pop %v1221
    %v1223 = vadd.f32 %v1222, 1.0
    %v1224 = vrcp.pop %v1223
    %v1225 = vmul.f32 1.0, %v1224
    %v1226 = vmul.f32 %v1218, %v1051
    %v1227 = vmul.f32 %v1212, %v1219
    %v1228 = vadd.f32 %v1226, %v1227
    %v1229 = vtanh.pop %v1228
    %v1230 = vmul.f32 %v1225, %v1229
    %v1231 = vld [vmem:[#allocation2 + $0xa0] sm:$0xff]
    %v1232 = vld [vmem:[#allocation2 + $0xa8] sm:$0xff]
    %v1233 = vld [vmem:[#allocation2 + $0xb0] sm:$0xff]
    %v1234 = vld [vmem:[#allocation2 + $0xb8] sm:$0xff]
    %v1236 = vsel %vm336, %v1230, 0
    %1238 = vmatprep.subr.mxu0 0.0
    %1239 = vmatpush1.msra.mxu0 0.0
    %1240 = vmatprep.subr.mxu0 0.0
    %1241 = vmatpush1.msra.mxu0 0.0
    %1242 = vmatprep.subr.mxu0 0.0
    %1243 = vmatpush1.msra.mxu0 0.0
    %1244 = vmatprep.subr.mxu0 0.0
    %1245 = vmatpush1.msra.mxu0 0.0
    %1246 = vmatprep.subr.mxu0 0.0
    %1247 = vmatpush1.msra.mxu0 0.0
    %1248 = vmatprep.subr.mxu0 0.0
    %1249 = vmatpush1.msra.mxu0 0.0
    %1250 = vmatprep.subr.mxu0 0.0
    %1251 = vmatpush1.msra.mxu0 0.0
    %1252 = vmatprep.subr.mxu0 0.0
    %1253 = vmatpush1.msra.mxu0 0.0
    %1254 = vmatprep.subr.mxu0 0.0
    %1255 = vmatpush1.msra.mxu0 0.0
    %1256 = vmatprep.subr.mxu0 0.0
    %1257 = vmatpush1.msra.mxu0 0.0
    %1258 = vmatprep.subr.mxu0 0.0
    %1259 = vmatpush1.msra.mxu0 0.0
    %1260 = vmatprep.subr.mxu0 0.0
    %1261 = vmatpush1.msra.mxu0 0.0
    %1262 = vmatprep.subr.mxu0 0.0
    %1263 = vmatpush1.msra.mxu0 0.0
    %1264 = vmatprep.subr.mxu0 %v345
    %1265 = vmatpush1.msra.mxu0 %v342
    %1266 = vmatprep.subr.mxu0 %v325
    %1267 = vmatpush1.msra.mxu0 %v324
    %1268 = vmatprep.subr.mxu0 %v321
    %1269 = vmatpush1.msra.mxu0 %v320
    %1270 = vmatprep.subr.mxu0 0.0
    %1271 = vmatpush2.msra.mxu0 0.0
    %1272 = vmatprep.subr.mxu0 0.0
    %1273 = vmatpush2.msra.mxu0 0.0
    %1274 = vmatprep.subr.mxu0 0.0
    %1275 = vmatpush2.msra.mxu0 0.0
    %1276 = vmatprep.subr.mxu0 0.0
    %1277 = vmatpush2.msra.mxu0 0.0
    %1278 = vmatprep.subr.mxu0 0.0
    %1279 = vmatpush2.msra.mxu0 0.0
    %1280 = vmatprep.subr.mxu0 0.0
    %1281 = vmatpush2.msra.mxu0 0.0
    %1282 = vmatprep.subr.mxu0 0.0
    %1283 = vmatpush2.msra.mxu0 0.0
    %1284 = vmatprep.subr.mxu0 0.0
    %1285 = vmatpush2.msra.mxu0 0.0
    %1286 = vmatprep.subr.mxu0 0.0
    %1287 = vmatpush2.msra.mxu0 0.0
    %1288 = vmatprep.subr.mxu0 0.0
    %1289 = vmatpush2.msra.mxu0 0.0
    %1290 = vmatprep.subr.mxu0 0.0
    %1291 = vmatpush2.msra.mxu0 0.0
    %1292 = vmatprep.subr.mxu0 0.0
    %1293 = vmatpush2.msra.mxu0 0.0
    %1294 = vmatprep.subr.mxu0 0.0
    %1295 = vmatpush2.msra.mxu0 0.0
    %1296 = vmatprep.subr.mxu0 0.0
    %1297 = vmatpush2.msra.mxu0 0.0
    %1298 = vmatprep.subr.mxu0 0.0
    %1299 = vmatpush2.msra.mxu0 0.0
    %1300 = vmatprep.subr.mxu0 0.0
    %1301 = vmatpush2.msra.mxu0 0.0
    %1302 = vmatprep.mubr.f32.mxu0 0.0
    %1303 = vmatmul.mubr.f32.gmra.mxu0 %v1236
    %v1304 = vpop.f32.mrf.mxu0
    %v1305 = vadd.f32 0.0, %v1304
    %v1306 = vpop.f32.mrf.mxu0
    %v1307 = vadd.f32 0.0, %v1306
    %1308 = vdwg.mxu0
    %1309 = vmatprep.subr.mxu0 0.0
    %1310 = vmatpush1.msra.mxu0 0.0
    %1311 = vmatprep.subr.mxu0 0.0
    %1312 = vmatpush1.msra.mxu0 0.0
    %1313 = vmatprep.subr.mxu0 0.0
    %1314 = vmatpush1.msra.mxu0 0.0
    %1315 = vmatprep.subr.mxu0 0.0
    %1316 = vmatpush1.msra.mxu0 0.0
    %1317 = vmatprep.subr.mxu0 0.0
    %1318 = vmatpush1.msra.mxu0 0.0
    %1319 = vmatprep.subr.mxu0 0.0
    %1320 = vmatpush1.msra.mxu0 0.0
    %1321 = vmatprep.subr.mxu0 0.0
    %1322 = vmatpush1.msra.mxu0 0.0
    %1323 = vmatprep.subr.mxu0 0.0
    %1324 = vmatpush1.msra.mxu0 0.0
    %1325 = vmatprep.subr.mxu0 0.0
    %1326 = vmatpush1.msra.mxu0 0.0
    %1327 = vmatprep.subr.mxu0 0.0
    %1328 = vmatpush1.msra.mxu0 0.0
    %1329 = vmatprep.subr.mxu0 0.0
    %1330 = vmatpush1.msra.mxu0 0.0
    %1331 = vmatprep.subr.mxu0 0.0
    %1332 = vmatpush1.msra.mxu0 0.0
    %1333 = vmatprep.subr.mxu0 0.0
    %1334 = vmatpush1.msra.mxu0 0.0
    %1335 = vmatprep.subr.mxu0 %v351
    %1336 = vmatpush1.msra.mxu0 %v348
    %1337 = vmatprep.subr.mxu0 %v327
    %1338 = vmatpush1.msra.mxu0 %v326
    %1339 = vmatprep.subr.mxu0 %v323
    %1340 = vmatpush1.msra.mxu0 %v322
    %1341 = vmatprep.subr.mxu0 0.0
    %1342 = vmatpush2.msra.mxu0 0.0
    %1343 = vmatprep.subr.mxu0 0.0
    %1344 = vmatpush2.msra.mxu0 0.0
    %1345 = vmatprep.subr.mxu0 0.0
    %1346 = vmatpush2.msra.mxu0 0.0
    %1347 = vmatprep.subr.mxu0 0.0
    %1348 = vmatpush2.msra.mxu0 0.0
    %1349 = vmatprep.subr.mxu0 0.0
    %1350 = vmatpush2.msra.mxu0 0.0
    %1351 = vmatprep.subr.mxu0 0.0
    %1352 = vmatpush2.msra.mxu0 0.0
    %1353 = vmatprep.subr.mxu0 0.0
    %1354 = vmatpush2.msra.mxu0 0.0
    %1355 = vmatprep.subr.mxu0 0.0
    %1356 = vmatpush2.msra.mxu0 0.0
    %1357 = vmatprep.subr.mxu0 0.0
    %1358 = vmatpush2.msra.mxu0 0.0
    %1359 = vmatprep.subr.mxu0 0.0
    %1360 = vmatpush2.msra.mxu0 0.0
    %1361 = vmatprep.subr.mxu0 0.0
    %1362 = vmatpush2.msra.mxu0 0.0
    %1363 = vmatprep.subr.mxu0 0.0
    %1364 = vmatpush2.msra.mxu0 0.0
    %1365 = vmatprep.subr.mxu0 0.0
    %1366 = vmatpush2.msra.mxu0 0.0
    %1367 = vmatprep.subr.mxu0 0.0
    %1368 = vmatpush2.msra.mxu0 0.0
    %1369 = vmatprep.subr.mxu0 0.0
    %1370 = vmatpush2.msra.mxu0 0.0
    %1371 = vmatprep.subr.mxu0 0.0
    %1372 = vmatpush2.msra.mxu0 0.0
    %1373 = vmatprep.mubr.f32.mxu0 0.0
    %1374 = vmatmul.mubr.f32.gmra.mxu0 %v1236
    %v1375 = vpop.f32.mrf.mxu0
    %v1376 = vadd.f32 0.0, %v1375
    %v1377 = vpop.f32.mrf.mxu0
    %v1378 = vadd.f32 0.0, %v1377
    %1379 = vdwg.mxu0
    %v1380 = vadd.f32 %v1231, %v1305
    %v1381 = vadd.f32 %v1232, %v1307
    %v1382 = vadd.f32 %v1233, %v1376
    %v1383 = vadd.f32 %v1234, %v1378
    %v1384 = vxor.u32 %v1380, 2147483648
    %v1385 = vmul.f32 %v1384, 1.442695
    %v1386 = vpow.pop %v1385
    %v1387 = vadd.f32 %v1386, 1.0
    %v1388 = vrcp.pop %v1387
    %v1389 = vmul.f32 1.0, %v1388
    %v1390 = vxor.u32 %v1381, 2147483648
    %v1391 = vmul.f32 %v1390, 1.442695
    %v1392 = vpow.pop %v1391
    %v1393 = vadd.f32 %v1392, 1.0
    %v1394 = vrcp.pop %v1393
    %v1395 = vmul.f32 1.0, %v1394
    %v1396 = vtanh.pop %v1382
    %v1397 = vxor.u32 %v1383, 2147483648
    %v1398 = vmul.f32 %v1397, 1.442695
    %v1399 = vpow.pop %v1398
    %v1400 = vadd.f32 %v1399, 1.0
    %v1401 = vrcp.pop %v1400
    %v1402 = vmul.f32 1.0, %v1401
    %v1403 = vmul.f32 %v1395, %v1228
    %v1404 = vmul.f32 %v1389, %v1396
    %v1405 = vadd.f32 %v1403, %v1404
    %v1406 = vtanh.pop %v1405
    %v1407 = vmul.f32 %v1402, %v1406
    %v1408 = vld [vmem:[#allocation2 + $0xc0] sm:$0xff]
    %v1409 = vld [vmem:[#allocation2 + $0xc8] sm:$0xff]
    %v1410 = vld [vmem:[#allocation2 + $0xd0] sm:$0xff]
    %v1411 = vld [vmem:[#allocation2 + $0xd8] sm:$0xff]
    %v1413 = vsel %vm336, %v1407, 0
    %1415 = vmatprep.subr.mxu0 0.0
    %1416 = vmatpush1.msra.mxu0 0.0
    %1417 = vmatprep.subr.mxu0 0.0
    %1418 = vmatpush1.msra.mxu0 0.0
    %1419 = vmatprep.subr.mxu0 0.0
    %1420 = vmatpush1.msra.mxu0 0.0
    %1421 = vmatprep.subr.mxu0 0.0
    %1422 = vmatpush1.msra.mxu0 0.0
    %1423 = vmatprep.subr.mxu0 0.0
    %1424 = vmatpush1.msra.mxu0 0.0
    %1425 = vmatprep.subr.mxu0 0.0
    %1426 = vmatpush1.msra.mxu0 0.0
    %1427 = vmatprep.subr.mxu0 0.0
    %1428 = vmatpush1.msra.mxu0 0.0
    %1429 = vmatprep.subr.mxu0 0.0
    %1430 = vmatpush1.msra.mxu0 0.0
    %1431 = vmatprep.subr.mxu0 0.0
    %1432 = vmatpush1.msra.mxu0 0.0
    %1433 = vmatprep.subr.mxu0 0.0
    %1434 = vmatpush1.msra.mxu0 0.0
    %1435 = vmatprep.subr.mxu0 0.0
    %1436 = vmatpush1.msra.mxu0 0.0
    %1437 = vmatprep.subr.mxu0 0.0
    %1438 = vmatpush1.msra.mxu0 0.0
    %1439 = vmatprep.subr.mxu0 0.0
    %1440 = vmatpush1.msra.mxu0 0.0
    %1441 = vmatprep.subr.mxu0 %v345
    %1442 = vmatpush1.msra.mxu0 %v342
    %1443 = vmatprep.subr.mxu0 %v325
    %1444 = vmatpush1.msra.mxu0 %v324
    %1445 = vmatprep.subr.mxu0 %v321
    %1446 = vmatpush1.msra.mxu0 %v320
    %1447 = vmatprep.subr.mxu0 0.0
    %1448 = vmatpush2.msra.mxu0 0.0
    %1449 = vmatprep.subr.mxu0 0.0
    %1450 = vmatpush2.msra.mxu0 0.0
    %1451 = vmatprep.subr.mxu0 0.0
    %1452 = vmatpush2.msra.mxu0 0.0
    %1453 = vmatprep.subr.mxu0 0.0
    %1454 = vmatpush2.msra.mxu0 0.0
    %1455 = vmatprep.subr.mxu0 0.0
    %1456 = vmatpush2.msra.mxu0 0.0
    %1457 = vmatprep.subr.mxu0 0.0
    %1458 = vmatpush2.msra.mxu0 0.0
    %1459 = vmatprep.subr.mxu0 0.0
    %1460 = vmatpush2.msra.mxu0 0.0
    %1461 = vmatprep.subr.mxu0 0.0
    %1462 = vmatpush2.msra.mxu0 0.0
    %1463 = vmatprep.subr.mxu0 0.0
    %1464 = vmatpush2.msra.mxu0 0.0
    %1465 = vmatprep.subr.mxu0 0.0
    %1466 = vmatpush2.msra.mxu0 0.0
    %1467 = vmatprep.subr.mxu0 0.0
    %1468 = vmatpush2.msra.mxu0 0.0
    %1469 = vmatprep.subr.mxu0 0.0
    %1470 = vmatpush2.msra.mxu0 0.0
    %1471 = vmatprep.subr.mxu0 0.0
    %1472 = vmatpush2.msra.mxu0 0.0
    %1473 = vmatprep.subr.mxu0 0.0
    %1474 = vmatpush2.msra.mxu0 0.0
    %1475 = vmatprep.subr.mxu0 0.0
    %1476 = vmatpush2.msra.mxu0 0.0
    %1477 = vmatprep.subr.mxu0 0.0
    %1478 = vmatpush2.msra.mxu0 0.0
    %1479 = vmatprep.mubr.f32.mxu0 0.0
    %1480 = vmatmul.mubr.f32.gmra.mxu0 %v1413
    %v1481 = vpop.f32.mrf.mxu0
    %v1482 = vadd.f32 0.0, %v1481
    %v1483 = vpop.f32.mrf.mxu0
    %v1484 = vadd.f32 0.0, %v1483
    %1485 = vdwg.mxu0
    %1486 = vmatprep.subr.mxu0 0.0
    %1487 = vmatpush1.msra.mxu0 0.0
    %1488 = vmatprep.subr.mxu0 0.0
    %1489 = vmatpush1.msra.mxu0 0.0
    %1490 = vmatprep.subr.mxu0 0.0
    %1491 = vmatpush1.msra.mxu0 0.0
    %1492 = vmatprep.subr.mxu0 0.0
    %1493 = vmatpush1.msra.mxu0 0.0
    %1494 = vmatprep.subr.mxu0 0.0
    %1495 = vmatpush1.msra.mxu0 0.0
    %1496 = vmatprep.subr.mxu0 0.0
    %1497 = vmatpush1.msra.mxu0 0.0
    %1498 = vmatprep.subr.mxu0 0.0
    %1499 = vmatpush1.msra.mxu0 0.0
    %1500 = vmatprep.subr.mxu0 0.0
    %1501 = vmatpush1.msra.mxu0 0.0
    %1502 = vmatprep.subr.mxu0 0.0
    %1503 = vmatpush1.msra.mxu0 0.0
    %1504 = vmatprep.subr.mxu0 0.0
    %1505 = vmatpush1.msra.mxu0 0.0
    %1506 = vmatprep.subr.mxu0 0.0
    %1507 = vmatpush1.msra.mxu0 0.0
    %1508 = vmatprep.subr.mxu0 0.0
    %1509 = vmatpush1.msra.mxu0 0.0
    %1510 = vmatprep.subr.mxu0 0.0
    %1511 = vmatpush1.msra.mxu0 0.0
    %1512 = vmatprep.subr.mxu0 %v351
    %1513 = vmatpush1.msra.mxu0 %v348
    %1514 = vmatprep.subr.mxu0 %v327
    %1515 = vmatpush1.msra.mxu0 %v326
    %1516 = vmatprep.subr.mxu0 %v323
    %1517 = vmatpush1.msra.mxu0 %v322
    %1518 = vmatprep.subr.mxu0 0.0
    %1519 = vmatpush2.msra.mxu0 0.0
    %1520 = vmatprep.subr.mxu0 0.0
    %1521 = vmatpush2.msra.mxu0 0.0
    %1522 = vmatprep.subr.mxu0 0.0
    %1523 = vmatpush2.msra.mxu0 0.0
    %1524 = vmatprep.subr.mxu0 0.0
    %1525 = vmatpush2.msra.mxu0 0.0
    %1526 = vmatprep.subr.mxu0 0.0
    %1527 = vmatpush2.msra.mxu0 0.0
    %1528 = vmatprep.subr.mxu0 0.0
    %1529 = vmatpush2.msra.mxu0 0.0
    %1530 = vmatprep.subr.mxu0 0.0
    %1531 = vmatpush2.msra.mxu0 0.0
    %1532 = vmatprep.subr.mxu0 0.0
    %1533 = vmatpush2.msra.mxu0 0.0
    %1534 = vmatprep.subr.mxu0 0.0
    %1535 = vmatpush2.msra.mxu0 0.0
    %1536 = vmatprep.subr.mxu0 0.0
    %1537 = vmatpush2.msra.mxu0 0.0
    %1538 = vmatprep.subr.mxu0 0.0
    %1539 = vmatpush2.msra.mxu0 0.0
    %1540 = vmatprep.subr.mxu0 0.0
    %1541 = vmatpush2.msra.mxu0 0.0
    %1542 = vmatprep.subr.mxu0 0.0
    %1543 = vmatpush2.msra.mxu0 0.0
    %1544 = vmatprep.subr.mxu0 0.0
    %1545 = vmatpush2.msra.mxu0 0.0
    %1546 = vmatprep.subr.mxu0 0.0
    %1547 = vmatpush2.msra.mxu0 0.0
    %1548 = vmatprep.subr.mxu0 0.0
    %1549 = vmatpush2.msra.mxu0 0.0
    %1550 = vmatprep.mubr.f32.mxu0 0.0
    %1551 = vmatmul.mubr.f32.gmra.mxu0 %v1413
    %v1552 = vpop.f32.mrf.mxu0
    %v1553 = vadd.f32 0.0, %v1552
    %v1554 = vpop.f32.mrf.mxu0
    %v1555 = vadd.f32 0.0, %v1554
    %1556 = vdwg.mxu0
    %v1557 = vadd.f32 %v1408, %v1482
    %v1558 = vadd.f32 %v1409, %v1484
    %v1559 = vadd.f32 %v1410, %v1553
    %v1560 = vadd.f32 %v1411, %v1555
    %v1561 = vxor.u32 %v1557, 2147483648
    %v1562 = vmul.f32 %v1561, 1.442695
    %v1563 = vpow.pop %v1562
    %v1564 = vadd.f32 %v1563, 1.0
    %v1565 = vrcp.pop %v1564
    %v1566 = vmul.f32 1.0, %v1565
    %v1567 = vxor.u32 %v1558, 2147483648
    %v1568 = vmul.f32 %v1567, 1.442695
    %v1569 = vpow.pop %v1568
    %v1570 = vadd.f32 %v1569, 1.0
    %v1571 = vrcp.pop %v1570
    %v1572 = vmul.f32 1.0, %v1571
    %v1573 = vtanh.pop %v1559
    %v1574 = vxor.u32 %v1560, 2147483648
    %v1575 = vmul.f32 %v1574, 1.442695
    %v1576 = vpow.pop %v1575
    %v1577 = vadd.f32 %v1576, 1.0
    %v1578 = vrcp.pop %v1577
    %v1579 = vmul.f32 1.0, %v1578
    %v1580 = vmul.f32 %v1572, %v1405
    %v1581 = vmul.f32 %v1566, %v1573
    %v1582 = vadd.f32 %v1580, %v1581
    %v1583 = vtanh.pop %v1582
    %v1584 = vmul.f32 %v1579, %v1583
    %v1585 = vld [vmem:[#allocation2 + $0xe0] sm:$0xff]
    %v1586 = vld [vmem:[#allocation2 + $0xe8] sm:$0xff]
    %v1587 = vld [vmem:[#allocation2 + $0xf0] sm:$0xff]
    %v1588 = vld [vmem:[#allocation2 + $0xf8] sm:$0xff]
    %v1590 = vsel %vm336, %v1584, 0
    %1592 = vmatprep.subr.mxu0 0.0
    %1593 = vmatpush1.msra.mxu0 0.0
    %1594 = vmatprep.subr.mxu0 0.0
    %1595 = vmatpush1.msra.mxu0 0.0
    %1596 = vmatprep.subr.mxu0 0.0
    %1597 = vmatpush1.msra.mxu0 0.0
    %1598 = vmatprep.subr.mxu0 0.0
    %1599 = vmatpush1.msra.mxu0 0.0
    %1600 = vmatprep.subr.mxu0 0.0
    %1601 = vmatpush1.msra.mxu0 0.0
    %1602 = vmatprep.subr.mxu0 0.0
    %1603 = vmatpush1.msra.mxu0 0.0
    %1604 = vmatprep.subr.mxu0 0.0
    %1605 = vmatpush1.msra.mxu0 0.0
    %1606 = vmatprep.subr.mxu0 0.0
    %1607 = vmatpush1.msra.mxu0 0.0
    %1608 = vmatprep.subr.mxu0 0.0
    %1609 = vmatpush1.msra.mxu0 0.0
    %1610 = vmatprep.subr.mxu0 0.0
    %1611 = vmatpush1.msra.mxu0 0.0
    %1612 = vmatprep.subr.mxu0 0.0
    %1613 = vmatpush1.msra.mxu0 0.0
    %1614 = vmatprep.subr.mxu0 0.0
    %1615 = vmatpush1.msra.mxu0 0.0
    %1616 = vmatprep.subr.mxu0 0.0
    %1617 = vmatpush1.msra.mxu0 0.0
    %1618 = vmatprep.subr.mxu0 %v345
    %1619 = vmatpush1.msra.mxu0 %v342
    %1620 = vmatprep.subr.mxu0 %v325
    %1621 = vmatpush1.msra.mxu0 %v324
    %1622 = vmatprep.subr.mxu0 %v321
    %1623 = vmatpush1.msra.mxu0 %v320
    %1624 = vmatprep.subr.mxu0 0.0
    %1625 = vmatpush2.msra.mxu0 0.0
    %1626 = vmatprep.subr.mxu0 0.0
    %1627 = vmatpush2.msra.mxu0 0.0
    %1628 = vmatprep.subr.mxu0 0.0
    %1629 = vmatpush2.msra.mxu0 0.0
    %1630 = vmatprep.subr.mxu0 0.0
    %1631 = vmatpush2.msra.mxu0 0.0
    %1632 = vmatprep.subr.mxu0 0.0
    %1633 = vmatpush2.msra.mxu0 0.0
    %1634 = vmatprep.subr.mxu0 0.0
    %1635 = vmatpush2.msra.mxu0 0.0
    %1636 = vmatprep.subr.mxu0 0.0
    %1637 = vmatpush2.msra.mxu0 0.0
    %1638 = vmatprep.subr.mxu0 0.0
    %1639 = vmatpush2.msra.mxu0 0.0
    %1640 = vmatprep.subr.mxu0 0.0
    %1641 = vmatpush2.msra.mxu0 0.0
    %1642 = vmatprep.subr.mxu0 0.0
    %1643 = vmatpush2.msra.mxu0 0.0
    %1644 = vmatprep.subr.mxu0 0.0
    %1645 = vmatpush2.msra.mxu0 0.0
    %1646 = vmatprep.subr.mxu0 0.0
    %1647 = vmatpush2.msra.mxu0 0.0
    %1648 = vmatprep.subr.mxu0 0.0
    %1649 = vmatpush2.msra.mxu0 0.0
    %1650 = vmatprep.subr.mxu0 0.0
    %1651 = vmatpush2.msra.mxu0 0.0
    %1652 = vmatprep.subr.mxu0 0.0
    %1653 = vmatpush2.msra.mxu0 0.0
    %1654 = vmatprep.subr.mxu0 0.0
    %1655 = vmatpush2.msra.mxu0 0.0
    %1656 = vmatprep.mubr.f32.mxu0 0.0
    %1657 = vmatmul.mubr.f32.gmra.mxu0 %v1590
    %v1658 = vpop.f32.mrf.mxu0
    %v1659 = vadd.f32 0.0, %v1658
    %v1660 = vpop.f32.mrf.mxu0
    %v1661 = vadd.f32 0.0, %v1660
    %1662 = vdwg.mxu0
    %1663 = vmatprep.subr.mxu0 0.0
    %1664 = vmatpush1.msra.mxu0 0.0
    %1665 = vmatprep.subr.mxu0 0.0
    %1666 = vmatpush1.msra.mxu0 0.0
    %1667 = vmatprep.subr.mxu0 0.0
    %1668 = vmatpush1.msra.mxu0 0.0
    %1669 = vmatprep.subr.mxu0 0.0
    %1670 = vmatpush1.msra.mxu0 0.0
    %1671 = vmatprep.subr.mxu0 0.0
    %1672 = vmatpush1.msra.mxu0 0.0
    %1673 = vmatprep.subr.mxu0 0.0
    %1674 = vmatpush1.msra.mxu0 0.0
    %1675 = vmatprep.subr.mxu0 0.0
    %1676 = vmatpush1.msra.mxu0 0.0
    %1677 = vmatprep.subr.mxu0 0.0
    %1678 = vmatpush1.msra.mxu0 0.0
    %1679 = vmatprep.subr.mxu0 0.0
    %1680 = vmatpush1.msra.mxu0 0.0
    %1681 = vmatprep.subr.mxu0 0.0
    %1682 = vmatpush1.msra.mxu0 0.0
    %1683 = vmatprep.subr.mxu0 0.0
    %1684 = vmatpush1.msra.mxu0 0.0
    %1685 = vmatprep.subr.mxu0 0.0
    %1686 = vmatpush1.msra.mxu0 0.0
    %1687 = vmatprep.subr.mxu0 0.0
    %1688 = vmatpush1.msra.mxu0 0.0
    %1689 = vmatprep.subr.mxu0 %v351
    %1690 = vmatpush1.msra.mxu0 %v348
    %1691 = vmatprep.subr.mxu0 %v327
    %1692 = vmatpush1.msra.mxu0 %v326
    %1693 = vmatprep.subr.mxu0 %v323
    %1694 = vmatpush1.msra.mxu0 %v322
    %1695 = vmatprep.subr.mxu0 0.0
    %1696 = vmatpush2.msra.mxu0 0.0
    %1697 = vmatprep.subr.mxu0 0.0
    %1698 = vmatpush2.msra.mxu0 0.0
    %1699 = vmatprep.subr.mxu0 0.0
    %1700 = vmatpush2.msra.mxu0 0.0
    %1701 = vmatprep.subr.mxu0 0.0
    %1702 = vmatpush2.msra.mxu0 0.0
    %1703 = vmatprep.subr.mxu0 0.0
    %1704 = vmatpush2.msra.mxu0 0.0
    %1705 = vmatprep.subr.mxu0 0.0
    %1706 = vmatpush2.msra.mxu0 0.0
    %1707 = vmatprep.subr.mxu0 0.0
    %1708 = vmatpush2.msra.mxu0 0.0
    %1709 = vmatprep.subr.mxu0 0.0
    %1710 = vmatpush2.msra.mxu0 0.0
    %1711 = vmatprep.subr.mxu0 0.0
    %1712 = vmatpush2.msra.mxu0 0.0
    %1713 = vmatprep.subr.mxu0 0.0
    %1714 = vmatpush2.msra.mxu0 0.0
    %1715 = vmatprep.subr.mxu0 0.0
    %1716 = vmatpush2.msra.mxu0 0.0
    %1717 = vmatprep.subr.mxu0 0.0
    %1718 = vmatpush2.msra.mxu0 0.0
    %1719 = vmatprep.subr.mxu0 0.0
    %1720 = vmatpush2.msra.mxu0 0.0
    %1721 = vmatprep.subr.mxu0 0.0
    %1722 = vmatpush2.msra.mxu0 0.0
    %1723 = vmatprep.subr.mxu0 0.0
    %1724 = vmatpush2.msra.mxu0 0.0
    %1725 = vmatprep.subr.mxu0 0.0
    %1726 = vmatpush2.msra.mxu0 0.0
    %1727 = vmatprep.mubr.f32.mxu0 0.0
    %1728 = vmatmul.mubr.f32.gmra.mxu0 %v1590
    %v1729 = vpop.f32.mrf.mxu0
    %v1730 = vadd.f32 0.0, %v1729
    %v1731 = vpop.f32.mrf.mxu0
    %v1732 = vadd.f32 0.0, %v1731
    %1733 = vdwg.mxu0
    %v1734 = vadd.f32 %v1585, %v1659
    %v1735 = vadd.f32 %v1586, %v1661
    %v1736 = vadd.f32 %v1587, %v1730
    %v1737 = vadd.f32 %v1588, %v1732
    %v1738 = vxor.u32 %v1734, 2147483648
    %v1739 = vmul.f32 %v1738, 1.442695
    %v1740 = vpow.pop %v1739
    %v1741 = vadd.f32 %v1740, 1.0
    %v1742 = vrcp.pop %v1741
    %v1743 = vmul.f32 1.0, %v1742
    %v1744 = vxor.u32 %v1735, 2147483648
    %v1745 = vmul.f32 %v1744, 1.442695
    %v1746 = vpow.pop %v1745
    %v1747 = vadd.f32 %v1746, 1.0
    %v1748 = vrcp.pop %v1747
    %v1749 = vmul.f32 1.0, %v1748
    %v1750 = vtanh.pop %v1736
    %v1751 = vxor.u32 %v1737, 2147483648
    %v1752 = vmul.f32 %v1751, 1.442695
    %v1753 = vpow.pop %v1752
    %v1754 = vadd.f32 %v1753, 1.0
    %v1755 = vrcp.pop %v1754
    %v1756 = vmul.f32 1.0, %v1755
    %v1757 = vmul.f32 %v1749, %v1582
    %v1758 = vmul.f32 %v1743, %v1750
    %v1759 = vadd.f32 %v1757, %v1758
    %v1760 = vtanh.pop %v1759
    %v1761 = vmul.f32 %v1756, %v1760
    %v1762 = vsel %vm336, %v1761, 0.0
    %v1763 = vrot.slane %v1762, 4
    %v1764 = vadd.f32 %v1762, %v1763
    %v1765 = vrot.slane %v1764, 2
    %v1766 = vadd.f32 %v1764, %v1765
    %v1767 = vrot.slane %v1766, 1
    %v1768 = vadd.f32 %v1766, %v1767
    %v1769 = vrcp.pop 8.0
    %v1770 = vmul.f32 %v1768, %v1769
    %v1771 = vmul.f32 %v1761, %v1761
    %v1772 = vsel %vm336, %v1771, 0.0
    %v1773 = vrot.slane %v1772, 4
    %v1774 = vadd.f32 %v1772, %v1773
    %v1775 = vrot.slane %v1774, 2
    %v1776 = vadd.f32 %v1774, %v1775
    %v1777 = vrot.slane %v1776, 1
    %v1778 = vadd.f32 %v1776, %v1777
    %v1779 = vmul.f32 %v1778, %v1769
    %v1780 = vmul.f32 %v1770, %v1770
    %v1781 = vsub.f32 %v1779, %v1780
    %v1782 = vsub.f32 %v1761, %v1770
    %v1783 = vadd.f32 %v1781, 1e-05
    %v1784 = vrsqrt.pop %v1783
    %v1785 = vmul.f32 %v1782, %v1784
    %v1786 = vld [vmem:[#allocation3 + $0x80] sm:$0xff]
    %v1787 = vld [vmem:[#allocation3 + $0xa0] sm:$0xff]
    %v1788 = vld [vmem:[#allocation3 + $0xc0] sm:$0xf]
    %v1789 = vld [vmem:[#allocation3 + $0xc4] ss:$0 sm:$0xff]
    %v1791 = vsel %vm336, %v1785, 0
    %v1794 = vsel %vm340, %v1788, 0
    %1796 = vmatprep.subr.mxu0 0.0
    %1797 = vmatpush1.msra.mxu0 0.0
    %1798 = vmatprep.subr.mxu0 0.0
    %1799 = vmatpush1.msra.mxu0 0.0
    %1800 = vmatprep.subr.mxu0 0.0
    %1801 = vmatpush1.msra.mxu0 0.0
    %1802 = vmatprep.subr.mxu0 0.0
    %1803 = vmatpush1.msra.mxu0 0.0
    %1804 = vmatprep.subr.mxu0 0.0
    %1805 = vmatpush1.msra.mxu0 0.0
    %1806 = vmatprep.subr.mxu0 0.0
    %1807 = vmatpush1.msra.mxu0 0.0
    %1808 = vmatprep.subr.mxu0 0.0
    %1809 = vmatpush1.msra.mxu0 0.0
    %1810 = vmatprep.subr.mxu0 0.0
    %1811 = vmatpush1.msra.mxu0 0.0
    %1812 = vmatprep.subr.mxu0 0.0
    %1813 = vmatpush1.msra.mxu0 0.0
    %1814 = vmatprep.subr.mxu0 0.0
    %1815 = vmatpush1.msra.mxu0 0.0
    %1816 = vmatprep.subr.mxu0 0.0
    %1817 = vmatpush1.msra.mxu0 0.0
    %1818 = vmatprep.subr.mxu0 0.0
    %1819 = vmatpush1.msra.mxu0 0.0
    %1820 = vmatprep.subr.mxu0 0.0
    %1821 = vmatpush1.msra.mxu0 0.0
    %1822 = vmatprep.subr.mxu0 0.0
    %1823 = vmatpush1.msra.mxu0 %v1794
    %1824 = vmatprep.subr.mxu0 0.0
    %1825 = vmatpush1.msra.mxu0 %v1787
    %1826 = vmatprep.subr.mxu0 0.0
    %1827 = vmatpush1.msra.mxu0 %v1786
    %1828 = vmatprep.subr.mxu0 0.0
    %1829 = vmatpush2.msra.mxu0 0.0
    %1830 = vmatprep.subr.mxu0 0.0
    %1831 = vmatpush2.msra.mxu0 0.0
    %1832 = vmatprep.subr.mxu0 0.0
    %1833 = vmatpush2.msra.mxu0 0.0
    %1834 = vmatprep.subr.mxu0 0.0
    %1835 = vmatpush2.msra.mxu0 0.0
    %1836 = vmatprep.subr.mxu0 0.0
    %1837 = vmatpush2.msra.mxu0 0.0
    %1838 = vmatprep.subr.mxu0 0.0
    %1839 = vmatpush2.msra.mxu0 0.0
    %1840 = vmatprep.subr.mxu0 0.0
    %1841 = vmatpush2.msra.mxu0 0.0
    %1842 = vmatprep.subr.mxu0 0.0
    %1843 = vmatpush2.msra.mxu0 0.0
    %1844 = vmatprep.subr.mxu0 0.0
    %1845 = vmatpush2.msra.mxu0 0.0
    %1846 = vmatprep.subr.mxu0 0.0
    %1847 = vmatpush2.msra.mxu0 0.0
    %1848 = vmatprep.subr.mxu0 0.0
    %1849 = vmatpush2.msra.mxu0 0.0
    %1850 = vmatprep.subr.mxu0 0.0
    %1851 = vmatpush2.msra.mxu0 0.0
    %1852 = vmatprep.subr.mxu0 0.0
    %1853 = vmatpush2.msra.mxu0 0.0
    %1854 = vmatprep.subr.mxu0 0.0
    %1855 = vmatpush2.msra.mxu0 0.0
    %1856 = vmatprep.subr.mxu0 0.0
    %1857 = vmatpush2.msra.mxu0 0.0
    %1858 = vmatprep.subr.mxu0 0.0
    %1859 = vmatpush2.msra.mxu0 0.0
    %1860 = vmatprep.mubr.f32.mxu0 0.0
    %1861 = vmatmul.mubr.f32.gmra.mxu0 %v1791
    %v1862 = vpop.f32.mrf.mxu0
    %v1863 = vadd.f32 %v1789, %v1862
    %v1864 = vpop.f32.mrf.mxu0
    %1865 = vdwg.mxu0
    %vm1866 = vcmask 7168
    %1867 = vst.msk [vmem:[%s2] sm:$0xff] %vm1866, %v1863
    // Predicated region
    $region14: #{tpu_custom_call.1} parent=1 // pred_check
      _
    $region15: #{tpu_custom_call.1} parent=1 // pred_check_branch
      %1869 = sbr.rel (0) target = $region17
    $region16: #{tpu_custom_call.1} parent=1 // pred_region
      _
    $region17: #{tpu_custom_call.1} parent=1 // pred_fallthru
      _
    // Predicated region
    $region18: #{tpu_custom_call.1} parent=1 // pred_check
      _
    $region19: #{tpu_custom_call.1} parent=1 // pred_check_branch
      %1871 = sbr.rel (0) target = $region21
    $region20: #{tpu_custom_call.1} parent=1 // pred_region
      _
    $region21: #{tpu_custom_call.1} parent=1 // pred_fallthru
      _
    %1872 = vsyncpa [#allocation4], 1

</llo_original>
